<compile_context>
chip_gen: v6e
topology: v6e:2x2x1
jax: 0.10.0
libtpu: 0.0.40
codegen_flags: <defaults>
</compile_context>

<pallas_src>
import jax
import jax.numpy as jnp
from jax.experimental import pallas as pl
from jax.experimental.pallas import tpu as pltpu

EPS = 1e-5  # nn.LayerNorm default

# Older/newer JAX naming compatibility for the TPU compiler-params class.
_CompilerParams = getattr(pltpu, "CompilerParams", None) or getattr(
    pltpu, "TPUCompilerParams"
)


def _layernorm(h, gamma, beta):
    mu = jnp.mean(h, axis=-1, keepdims=True)
    var = jnp.mean((h - mu) ** 2, axis=-1, keepdims=True)
    return (h - mu) * jax.lax.rsqrt(var + EPS) * gamma + beta


def _make_kernel(H, out_pad, matmul_dtype):
    def kernel(x_ref, wx_ref, wh_ref, wo_ref, vec_ref, o_ref):
        x = x_ref[...].astype(matmul_dtype)
        v = vec_ref[...]  # (8, VEC_W) f32 parameter slab

        # Fused first-layer + transform-branch matmul: one (D_in, 2H) push.
        y = jnp.dot(x, wx_ref[...], preferred_element_type=jnp.float32)
        y = y + v[0:1, :2 * H]
        h = _layernorm(y[:, :H], v[1:2, :H], v[2:3, :H])                 # linears[0] + norms[0]
        r = _layernorm(y[:, H:2 * H], v[1:2, H:2 * H], v[2:3, H:2 * H])  # transform branch

        # Hidden layer 2: ReLU -> Linear -> LayerNorm (no ReLU after the last
        # hidden pair, matching the PyTorch loop).
        h = jnp.maximum(h, 0.0).astype(matmul_dtype)
        h = jnp.dot(h, wh_ref[...], preferred_element_type=jnp.float32) + v[3:4, :H]
        h = _layernorm(h, v[4:5, :H], v[5:6, :H])

        # Residual add + ReLU, then lane-dense (zero-padded) output projection.
        h = jnp.maximum(h + r, 0.0).astype(matmul_dtype)
        out = jnp.dot(h, wo_ref[...], preferred_element_type=jnp.float32)
        o_ref[...] = (out + v[6:7, :out_pad]).astype(o_ref.dtype)

    return kernel


def _round_up(n, m):
    return ((n + m - 1) // m) * m


def pack_params(p, d_out, matmul_dtype=jnp.float32):
    """Pack the 14 small parameter tensors into 4 DMA-friendly arrays.

    Weights are pre-cast to `matmul_dtype` (MXU operand dtype); the output
    projection is zero-padded to a 128-lane slab so the kernel's store is a
    full unmasked vst with contiguous HBM writeback.  No output_dim<=hidden
    restriction (wo is kept as its own array).
    """
    d_in, H = p["w0"].shape
    out_pad = max(128, _round_up(d_out, 128))
    vec_w = max(2 * H, out_pad)

    wx = jnp.concatenate([p["w0"], p["wt"]], axis=1).astype(matmul_dtype)      # (D_in, 2H)
    wh = p["w1"].astype(matmul_dtype)                                          # (H, H)
    wo = jnp.pad(p["wo"], ((0, 0), (0, out_pad - d_out))).astype(matmul_dtype)  # (H, out_pad)

    def row(a):
        a = a.reshape(1, -1)
        return jnp.pad(a, ((0, 0), (0, vec_w - a.shape[1])))

    vecs = jnp.concatenate([
        row(jnp.concatenate([p["b0"], p["bt"]], axis=1)),    # row 0: [b0 | bt]
        row(jnp.concatenate([p["g0"], p["gt"]], axis=1)),    # row 1: [g0 | gt]
        row(jnp.concatenate([p["be0"], p["bet"]], axis=1)),  # row 2: [be0| bet]
        row(p["b1"]),                                        # row 3: b1
        row(p["g1"]),                                        # row 4: g1
        row(p["be1"]),                                       # row 5: be1
        row(p["bo"]),                                        # row 6: bo (padded to out_pad)
        jnp.zeros((1, vec_w), jnp.float32),                  # row 7: sublane pad
    ], axis=0).astype(jnp.float32)                           # (8, vec_w)

    return {"wx": wx, "wh": wh, "wo": wo, "vecs": vecs,
            "d_out": int(d_out), "hidden": int(H)}


def _num_tensorcores_per_chip():
    """Best-effort: megacore parts (v4 / v5p / v7x) have 2 TCs per chip."""
    try:
        kind = jax.devices()[0].device_kind.lower()
    except Exception:
        return 1
    if any(tag in kind for tag in ("v7", "v4", "v5p")):
        return 2
    return 1


def _vmem_budget_bytes():
    """Half of physical VMEM when queryable; conservative 32 MiB otherwise."""
    try:
        info_fn = getattr(pltpu, "get_tpu_info", None)
        if info_fn is not None:
            return max(8 << 20, int(info_fn().vmem_capacity_bytes) // 2)
    except Exception:
        pass
    return 32 << 20


def _auto_tile_m(B, d_in, hidden, out_pad, num_cores, vmem_budget):
    """Largest multiple-of-8 row tile that divides B and fits the VMEM budget.

    Single-TC chips get one grid step (per-step overhead dominates at these
    shapes); megacore chips keep at least `num_cores` steps for sharding.
    """
    # Per-row VMEM bytes: double-buffered f32 x/out tiles + f32 intermediates.
    per_row = 4 * (2 * d_in + 2 * out_pad + 4 * hidden + out_pad)
    cap = max(8, vmem_budget // max(per_row, 1))
    cands = [t for t in range(8, min(B, cap) + 1, 8) if B % t == 0]
    if not cands:
        return B  # block == full dim is always a legal block shape
    if num_cores >= 2:
        multi = [t for t in cands if B // t >= num_cores]
        if multi:
            return max(multi)
    return max(cands)


def residual_mlp(x, packed, *, tile_m=None):
    B, D_in = x.shape
    H = packed["hidden"]
    D_out = packed["d_out"]
    out_pad = packed["wo"].shape[1]
    matmul_dtype = packed["wx"].dtype
    assert packed["wx"].shape[0] == D_in

    num_cores = _num_tensorcores_per_chip()
    vmem_budget = _vmem_budget_bytes()
    if tile_m is None:
        tile_m = _auto_tile_m(B, D_in, H, out_pad, num_cores, vmem_budget)
    assert B % tile_m == 0, "tile_m must divide B (pad the batch otherwise)"

    kernel = _make_kernel(H, out_pad, matmul_dtype)

    def const_spec(arr):
        nd = arr.ndim
        return pl.BlockSpec(arr.shape, lambda i, _nd=nd: (0,) * _nd)

    out_padded = pl.pallas_call(
        kernel,
        out_shape=jax.ShapeDtypeStruct((B, out_pad), x.dtype),
        grid=(B // tile_m,),
        in_specs=[
            pl.BlockSpec((tile_m, D_in), lambda i: (i, 0)),
            const_spec(packed["wx"]),
            const_spec(packed["wh"]),
            const_spec(packed["wo"]),
            const_spec(packed["vecs"]),
        ],
        out_specs=pl.BlockSpec((tile_m, out_pad), lambda i: (i, 0)),
        compiler_params=_CompilerParams(
            dimension_semantics=("parallel",),
            vmem_limit_bytes=int(vmem_budget),
        ),
    )(x, packed["wx"], packed["wh"], packed["wo"], packed["vecs"])

    # Lane-dense padded slab from the kernel; slice to logical width in XLA.
    return out_padded[:, :D_out]


def init_params(key, input_dim, hidden_dim, output_dim):
    ks = jax.random.split(key, 8)
    scale = 0.05

    def lin(k, din, dout):
        kw, kb = jax.random.split(k)
        w = scale * jax.random.normal(kw, (din, dout), jnp.float32)
        b = scale * jax.random.normal(kb, (1, dout), jnp.float32)
        return w, b

    def ln(k, d):
        kg, kb = jax.random.split(k)
        g = 1.0 + 0.1 * jax.random.normal(kg, (1, d), jnp.float32)
        b = 0.1 * jax.random.normal(kb, (1, d), jnp.float32)
        return g, b

    p = {}
    p["w0"], p["b0"] = lin(ks[0], input_dim, hidden_dim)
    p["g0"], p["be0"] = ln(ks[1], hidden_dim)
    p["w1"], p["b1"] = lin(ks[2], hidden_dim, hidden_dim)
    p["g1"], p["be1"] = ln(ks[3], hidden_dim)
    p["wt"], p["bt"] = lin(ks[4], input_dim, hidden_dim)
    p["gt"], p["bet"] = ln(ks[5], hidden_dim)
    p["wo"], p["bo"] = lin(ks[6], hidden_dim, output_dim)
    return p


def residual_mlp_ref(x, p):
    hp = jax.lax.Precision.HIGHEST

    def ln(h, g, b):
        mu = jnp.mean(h, -1, keepdims=True)
        var = jnp.mean((h - mu) ** 2, -1, keepdims=True)
        return (h - mu) * jax.lax.rsqrt(var + EPS) * g + b

    h = ln(jnp.dot(x, p["w0"], precision=hp) + p["b0"], p["g0"], p["be0"])
    h = jnp.maximum(h, 0.0)
    h = ln(jnp.dot(h, p["w1"], precision=hp) + p["b1"], p["g1"], p["be1"])
    r = ln(jnp.dot(x, p["wt"], precision=hp) + p["bt"], p["gt"], p["bet"])
    h = jnp.maximum(h + r, 0.0)
    return jnp.dot(h, p["wo"], precision=hp) + p["bo"]


if __name__ == "__main__":
    B, input_dim, hidden_dim, output_dim = 256, 32, 32, 16
    key = jax.random.PRNGKey(0)
    kx, kp = jax.random.split(key)
    x = jax.random.normal(kx, (B, input_dim), jnp.float32)
    params = init_params(kp, input_dim, hidden_dim, output_dim)

    ref = residual_mlp_ref(x, params)

    # f32 MXU-operand path (matches the PyTorch module's f32 forward pass).
    packed_f32 = pack_params(params, output_dim, matmul_dtype=jnp.float32)
    out = jax.block_until_ready(residual_mlp(x, packed_f32))
    assert out.shape == (B, output_dim)
    assert jnp.allclose(out, ref, rtol=1e-3, atol=1e-3), "f32 kernel mismatch"

    # bf16 MXU-operand path (pre-cast weights; LN/ReLU/accumulation stay f32).
    # Relative-error check against the f32 kernel output per the review.
    packed_bf16 = pack_params(params, output_dim, matmul_dtype=jnp.bfloat16)
    out_bf16 = jax.block_until_ready(residual_mlp(x, packed_bf16))
    rel = float(jnp.max(jnp.abs(out_bf16 - out)) / (jnp.max(jnp.abs(out)) + 1e-6))
    assert rel < 5e-2, f"bf16 kernel drift too large: rel={rel}"

    print("KERNEL_OK")
</pallas_src>

<mosaic_0001>
module attributes {stable_mosaic.version = 11 : i64} {
  func.func @kernel(%arg0: i32, %arg1: memref<256x32xf32, #tpu.memory_space<vmem>>, %arg2: memref<32x64xf32, #tpu.memory_space<vmem>>, %arg3: memref<32x32xf32, #tpu.memory_space<vmem>>, %arg4: memref<32x128xf32, #tpu.memory_space<vmem>>, %arg5: memref<8x128xf32, #tpu.memory_space<vmem>>, %arg6: memref<256x128xf32, #tpu.memory_space<vmem>>) attributes {dimension_semantics = [#tpu.dimension_semantics<parallel>], iteration_bounds = array<i64: 1>, scalar_prefetch = 0 : i64, scratch_operands = 0 : i64, tpu.core_type = #tpu.core_type<tc>, window_params = [{transform_indices = @transform_0, window_bounds = array<i64: 256, 32>}, {pipeline_mode = #tpu.pipeline_mode<synchronous>, transform_indices = @transform_1, window_bounds = array<i64: 32, 64>}, {pipeline_mode = #tpu.pipeline_mode<synchronous>, transform_indices = @transform_2, window_bounds = array<i64: 32, 32>}, {pipeline_mode = #tpu.pipeline_mode<synchronous>, transform_indices = @transform_3, window_bounds = array<i64: 32, 128>}, {pipeline_mode = #tpu.pipeline_mode<synchronous>, transform_indices = @transform_4, window_bounds = array<i64: 8, 128>}, {transform_indices = @transform_5, window_bounds = array<i64: 256, 128>}]} {
    %c0 = arith.constant 0 : index
    %c0_0 = arith.constant 0 : index
    %0 = vector.load %arg1[%c0, %c0_0] : memref<256x32xf32, #tpu.memory_space<vmem>>, vector<256x32xf32>
    %c0_1 = arith.constant 0 : index
    %c0_2 = arith.constant 0 : index
    %1 = vector.load %arg5[%c0_1, %c0_2] : memref<8x128xf32, #tpu.memory_space<vmem>>, vector<8x128xf32>
    %c0_3 = arith.constant 0 : index
    %c0_4 = arith.constant 0 : index
    %2 = vector.load %arg2[%c0_3, %c0_4] : memref<32x64xf32, #tpu.memory_space<vmem>>, vector<32x64xf32>
    %cst = arith.constant dense<0.000000e+00> : vector<256x64xf32>
    %3 = tpu.matmul %0, %2, %cst {dimension_numbers = #tpu.dot_dimension_numbers<[1], [0], [0], [1], [0, 0, 1, 1], [], []>} : vector<256x32xf32>, vector<32x64xf32>, vector<256x64xf32> -> vector<256x64xf32>
    %4 = vector.extract_strided_slice %1 {offsets = [0, 0], sizes = [1, 64], strides = [1, 1]} : vector<8x128xf32> to vector<1x64xf32>
    %5 = vector.broadcast %4 : vector<1x64xf32> to vector<256x64xf32>
    %6 = arith.addf %3, %5 : vector<256x64xf32>
    %7 = vector.extract_strided_slice %6 {offsets = [0, 0], sizes = [256, 32], strides = [1, 1]} : vector<256x64xf32> to vector<256x32xf32>
    %8 = vector.extract_strided_slice %1 {offsets = [1, 0], sizes = [1, 32], strides = [1, 1]} : vector<8x128xf32> to vector<1x32xf32>
    %9 = vector.extract_strided_slice %1 {offsets = [2, 0], sizes = [1, 32], strides = [1, 1]} : vector<8x128xf32> to vector<1x32xf32>
    %cst_5 = arith.constant dense<0.000000e+00> : vector<256xf32>
    %10 = vector.multi_reduction <add>, %7, %cst_5 [1] : vector<256x32xf32> to vector<256xf32>
    %11 = vector.shape_cast %10 : vector<256xf32> to vector<256x1xf32>
    %cst_6 = arith.constant 3.200000e+01 : f32
    %12 = vector.broadcast %cst_6 : f32 to vector<256x1xf32>
    %13 = arith.divf %11, %12 : vector<256x1xf32>
    %14 = vector.broadcast %13 : vector<256x1xf32> to vector<256x32xf32>
    %15 = arith.subf %7, %14 : vector<256x32xf32>
    %16 = arith.mulf %15, %15 : vector<256x32xf32>
    %cst_7 = arith.constant dense<0.000000e+00> : vector<256xf32>
    %17 = vector.multi_reduction <add>, %16, %cst_7 [1] : vector<256x32xf32> to vector<256xf32>
    %18 = vector.shape_cast %17 : vector<256xf32> to vector<256x1xf32>
    %cst_8 = arith.constant 3.200000e+01 : f32
    %19 = vector.broadcast %cst_8 : f32 to vector<256x1xf32>
    %20 = arith.divf %18, %19 : vector<256x1xf32>
    %21 = vector.broadcast %13 : vector<256x1xf32> to vector<256x32xf32>
    %22 = arith.subf %7, %21 : vector<256x32xf32>
    %cst_9 = arith.constant 9.99999974E-6 : f32
    %23 = vector.broadcast %cst_9 : f32 to vector<256x1xf32>
    %24 = arith.addf %20, %23 : vector<256x1xf32>
    %25 = math.rsqrt %24 : vector<256x1xf32>
    %26 = vector.broadcast %25 : vector<256x1xf32> to vector<256x32xf32>
    %27 = arith.mulf %22, %26 : vector<256x32xf32>
    %28 = vector.broadcast %8 : vector<1x32xf32> to vector<256x32xf32>
    %29 = arith.mulf %27, %28 : vector<256x32xf32>
    %30 = vector.broadcast %9 : vector<1x32xf32> to vector<256x32xf32>
    %31 = arith.addf %29, %30 : vector<256x32xf32>
    %32 = vector.extract_strided_slice %6 {offsets = [0, 32], sizes = [256, 32], strides = [1, 1]} : vector<256x64xf32> to vector<256x32xf32>
    %33 = vector.extract_strided_slice %1 {offsets = [1, 32], sizes = [1, 32], strides = [1, 1]} : vector<8x128xf32> to vector<1x32xf32>
    %34 = vector.extract_strided_slice %1 {offsets = [2, 32], sizes = [1, 32], strides = [1, 1]} : vector<8x128xf32> to vector<1x32xf32>
    %cst_10 = arith.constant dense<0.000000e+00> : vector<256xf32>
    %35 = vector.multi_reduction <add>, %32, %cst_10 [1] : vector<256x32xf32> to vector<256xf32>
    %36 = vector.shape_cast %35 : vector<256xf32> to vector<256x1xf32>
    %cst_11 = arith.constant 3.200000e+01 : f32
    %37 = vector.broadcast %cst_11 : f32 to vector<256x1xf32>
    %38 = arith.divf %36, %37 : vector<256x1xf32>
    %39 = vector.broadcast %38 : vector<256x1xf32> to vector<256x32xf32>
    %40 = arith.subf %32, %39 : vector<256x32xf32>
    %41 = arith.mulf %40, %40 : vector<256x32xf32>
    %cst_12 = arith.constant dense<0.000000e+00> : vector<256xf32>
    %42 = vector.multi_reduction <add>, %41, %cst_12 [1] : vector<256x32xf32> to vector<256xf32>
    %43 = vector.shape_cast %42 : vector<256xf32> to vector<256x1xf32>
    %cst_13 = arith.constant 3.200000e+01 : f32
    %44 = vector.broadcast %cst_13 : f32 to vector<256x1xf32>
    %45 = arith.divf %43, %44 : vector<256x1xf32>
    %46 = vector.broadcast %38 : vector<256x1xf32> to vector<256x32xf32>
    %47 = arith.subf %32, %46 : vector<256x32xf32>
    %cst_14 = arith.constant 9.99999974E-6 : f32
    %48 = vector.broadcast %cst_14 : f32 to vector<256x1xf32>
    %49 = arith.addf %45, %48 : vector<256x1xf32>
    %50 = math.rsqrt %49 : vector<256x1xf32>
    %51 = vector.broadcast %50 : vector<256x1xf32> to vector<256x32xf32>
    %52 = arith.mulf %47, %51 : vector<256x32xf32>
    %53 = vector.broadcast %33 : vector<1x32xf32> to vector<256x32xf32>
    %54 = arith.mulf %52, %53 : vector<256x32xf32>
    %55 = vector.broadcast %34 : vector<1x32xf32> to vector<256x32xf32>
    %56 = arith.addf %54, %55 : vector<256x32xf32>
    %cst_15 = arith.constant 0.000000e+00 : f32
    %57 = vector.broadcast %cst_15 : f32 to vector<256x32xf32>
    %58 = arith.maximumf %31, %57 : vector<256x32xf32>
    %c0_16 = arith.constant 0 : index
    %c0_17 = arith.constant 0 : index
    %59 = vector.load %arg3[%c0_16, %c0_17] : memref<32x32xf32, #tpu.memory_space<vmem>>, vector<32x32xf32>
    %cst_18 = arith.constant dense<0.000000e+00> : vector<256x32xf32>
    %60 = tpu.matmul %58, %59, %cst_18 {dimension_numbers = #tpu.dot_dimension_numbers<[1], [0], [0], [1], [0, 0, 1, 1], [], []>} : vector<256x32xf32>, vector<32x32xf32>, vector<256x32xf32> -> vector<256x32xf32>
    %61 = vector.extract_strided_slice %1 {offsets = [3, 0], sizes = [1, 32], strides = [1, 1]} : vector<8x128xf32> to vector<1x32xf32>
    %62 = vector.broadcast %61 : vector<1x32xf32> to vector<256x32xf32>
    %63 = arith.addf %60, %62 : vector<256x32xf32>
    %64 = vector.extract_strided_slice %1 {offsets = [4, 0], sizes = [1, 32], strides = [1, 1]} : vector<8x128xf32> to vector<1x32xf32>
    %65 = vector.extract_strided_slice %1 {offsets = [5, 0], sizes = [1, 32], strides = [1, 1]} : vector<8x128xf32> to vector<1x32xf32>
    %cst_19 = arith.constant dense<0.000000e+00> : vector<256xf32>
    %66 = vector.multi_reduction <add>, %63, %cst_19 [1] : vector<256x32xf32> to vector<256xf32>
    %67 = vector.shape_cast %66 : vector<256xf32> to vector<256x1xf32>
    %cst_20 = arith.constant 3.200000e+01 : f32
    %68 = vector.broadcast %cst_20 : f32 to vector<256x1xf32>
    %69 = arith.divf %67, %68 : vector<256x1xf32>
    %70 = vector.broadcast %69 : vector<256x1xf32> to vector<256x32xf32>
    %71 = arith.subf %63, %70 : vector<256x32xf32>
    %72 = arith.mulf %71, %71 : vector<256x32xf32>
    %cst_21 = arith.constant dense<0.000000e+00> : vector<256xf32>
    %73 = vector.multi_reduction <add>, %72, %cst_21 [1] : vector<256x32xf32> to vector<256xf32>
    %74 = vector.shape_cast %73 : vector<256xf32> to vector<256x1xf32>
    %cst_22 = arith.constant 3.200000e+01 : f32
    %75 = vector.broadcast %cst_22 : f32 to vector<256x1xf32>
    %76 = arith.divf %74, %75 : vector<256x1xf32>
    %77 = vector.broadcast %69 : vector<256x1xf32> to vector<256x32xf32>
    %78 = arith.subf %63, %77 : vector<256x32xf32>
    %cst_23 = arith.constant 9.99999974E-6 : f32
    %79 = vector.broadcast %cst_23 : f32 to vector<256x1xf32>
    %80 = arith.addf %76, %79 : vector<256x1xf32>
    %81 = math.rsqrt %80 : vector<256x1xf32>
    %82 = vector.broadcast %81 : vector<256x1xf32> to vector<256x32xf32>
    %83 = arith.mulf %78, %82 : vector<256x32xf32>
    %84 = vector.broadcast %64 : vector<1x32xf32> to vector<256x32xf32>
    %85 = arith.mulf %83, %84 : vector<256x32xf32>
    %86 = vector.broadcast %65 : vector<1x32xf32> to vector<256x32xf32>
    %87 = arith.addf %85, %86 : vector<256x32xf32>
    %88 = arith.addf %87, %56 : vector<256x32xf32>
    %cst_24 = arith.constant 0.000000e+00 : f32
    %89 = vector.broadcast %cst_24 : f32 to vector<256x32xf32>
    %90 = arith.maximumf %88, %89 : vector<256x32xf32>
    %c0_25 = arith.constant 0 : index
    %c0_26 = arith.constant 0 : index
    %91 = vector.load %arg4[%c0_25, %c0_26] : memref<32x128xf32, #tpu.memory_space<vmem>>, vector<32x128xf32>
    %cst_27 = arith.constant dense<0.000000e+00> : vector<256x128xf32>
    %92 = tpu.matmul %90, %91, %cst_27 {dimension_numbers = #tpu.dot_dimension_numbers<[1], [0], [0], [1], [0, 0, 1, 1], [], []>} : vector<256x32xf32>, vector<32x128xf32>, vector<256x128xf32> -> vector<256x128xf32>
    %93 = vector.extract_strided_slice %1 {offsets = [6, 0], sizes = [1, 128], strides = [1, 1]} : vector<8x128xf32> to vector<1x128xf32>
    %94 = vector.broadcast %93 : vector<1x128xf32> to vector<256x128xf32>
    %95 = arith.addf %92, %94 : vector<256x128xf32>
    %c0_28 = arith.constant 0 : index
    %c0_29 = arith.constant 0 : index
    %96 = vector.load %arg6[%c0_28, %c0_29] : memref<256x128xf32, #tpu.memory_space<vmem>>, vector<256x128xf32>
    tpu.vector_store %arg6[%c0_28, %c0_29], %95 {strides = array<i32>} : memref<256x128xf32, #tpu.memory_space<vmem>>, vector<256x128xf32>,
    return
  }
  func.func @transform_0(%arg0: i32) -> (i32, i32) {
    %c0_i32 = arith.constant 0 : i32
    %c0_i32_0 = arith.constant 0 : i32
    return %arg0, %c0_i32 : i32, i32
  }
  func.func @transform_1(%arg0: i32) -> (i32, i32) {
    %c0_i32 = arith.constant 0 : i32
    %c0_i32_0 = arith.constant 0 : i32
    %c0_i32_1 = arith.constant 0 : i32
    return %c0_i32, %c0_i32_0 : i32, i32
  }
  func.func @transform_2(%arg0: i32) -> (i32, i32) {
    %c0_i32 = arith.constant 0 : i32
    %c0_i32_0 = arith.constant 0 : i32
    %c0_i32_1 = arith.constant 0 : i32
    return %c0_i32, %c0_i32_0 : i32, i32
  }
  func.func @transform_3(%arg0: i32) -> (i32, i32) {
    %c0_i32 = arith.constant 0 : i32
    %c0_i32_0 = arith.constant 0 : i32
    %c0_i32_1 = arith.constant 0 : i32
    return %c0_i32, %c0_i32_0 : i32, i32
  }
  func.func @transform_4(%arg0: i32) -> (i32, i32) {
    %c0_i32 = arith.constant 0 : i32
    %c0_i32_0 = arith.constant 0 : i32
    %c0_i32_1 = arith.constant 0 : i32
    return %c0_i32, %c0_i32_0 : i32, i32
  }
  func.func @transform_5(%arg0: i32) -> (i32, i32) {
    %c0_i32 = arith.constant 0 : i32
    %c0_i32_0 = arith.constant 0 : i32
    return %arg0, %c0_i32 : i32, i32
  }
}

</mosaic_0001>

<llo_original>
// kernel: tpu_custom_call.1
$region0: #{tpu_custom_call.1}
  #allocation0 [shape = 'u32[]', space=smem, size = 0x4, offset = 0x4, fixed_abs, tag = 'smem constant byte address 0x4 - core index']
  #allocation1 [shape = 'u32[144,128]{1,0:T(1,128)}', space=vmem, size = 0x12000, scoped, tag = 'internal scratch']
  %s0 = inlined_call_operand.vmem [shape: f32[256,32], index: 0, kind: input, shape index: {}]
  %s1 = inlined_call_operand.vmem [shape: f32[32,64], index: 1, kind: input, shape index: {}]
  %s2 = inlined_call_operand.vmem [shape: f32[32,32], index: 2, kind: input, shape index: {}]
  %s3 = inlined_call_operand.vmem [shape: f32[32,128], index: 3, kind: input, shape index: {}]
  %s4 = inlined_call_operand.vmem [shape: f32[8,128], index: 4, kind: input, shape index: {}]
  %s5 = inlined_call_operand.hbm [shape: f32[256,128], index: 5, kind: output, shape index: {}]
  %s6 = sld [smem:[#allocation0]]
  $region30: #{tpu_custom_call.1} parent=0
    _
  %s8 = ssub.s32 1, %s6
  %s9 = scalar_select 0, %s8, %s6
  $region1: #{tpu_custom_call.1} parent=0
    #allocation2 [shape = 'u8[131072]{0}', space=vmem, size = 0x20000, scoped, tag = 'output window, operand 0, single buffered']
    #allocation3 [shape = 's32[1]{0}', space=sflag, size = 0x4, scoped, tag = 'scoped memory for tpu_custom_call.1']
    %10 = vsyncpa [#allocation3], 0
    // Predicated region
    $region2: #{tpu_custom_call.1} parent=1 // pred_check
      _
    $region3: #{tpu_custom_call.1} parent=1 // pred_check_branch
      %12 = sbr.rel (0) target = $region5
    $region4: #{tpu_custom_call.1} parent=1 // pred_region
      _
    $region5: #{tpu_custom_call.1} parent=1 // pred_fallthru
      _
    // Predicated region
    $region6: #{tpu_custom_call.1} parent=1 // pred_check
      _
    $region7: #{tpu_custom_call.1} parent=1 // pred_check_branch
      %14 = sbr.rel (0) target = $region9
    $region8: #{tpu_custom_call.1} parent=1 // pred_region
      _
    $region9: #{tpu_custom_call.1} parent=1 // pred_fallthru
      _
    // Predicated region
    $region10: #{tpu_custom_call.1} parent=1 // pred_check
      _
    $region11: #{tpu_custom_call.1} parent=1 // pred_check_branch
      %16 = sbr.rel (0) target = $region13
    $region12: #{tpu_custom_call.1} parent=1 // pred_region
      _
    $region13: #{tpu_custom_call.1} parent=1 // pred_fallthru
      _
    // Predicated region
    $region14: #{tpu_custom_call.1} parent=1 // pred_check
      _
    $region15: #{tpu_custom_call.1} parent=1 // pred_check_branch
      %18 = sbr.rel (0) target = $region17
    $region16: #{tpu_custom_call.1} parent=1 // pred_region
      _
    $region17: #{tpu_custom_call.1} parent=1 // pred_fallthru
      _
    // Predicated region
    $region18: #{tpu_custom_call.1} parent=1 // pred_check
      _
    $region19: #{tpu_custom_call.1} parent=1 // pred_check_branch
      %20 = sbr.rel (0) target = $region21
    $region20: #{tpu_custom_call.1} parent=1 // pred_region
      _
    $region21: #{tpu_custom_call.1} parent=1 // pred_fallthru
      _
    %v21 = vld [vmem:[%s0] sm:$0xff]
    %v22 = vld [vmem:[%s0 + $0x8] sm:$0xff]
    %v23 = vld [vmem:[%s0 + $0x10] sm:$0xff]
    %v24 = vld [vmem:[%s0 + $0x18] sm:$0xff]
    %v25 = vld [vmem:[%s0 + $0x20] sm:$0xff]
    %v26 = vld [vmem:[%s0 + $0x28] sm:$0xff]
    %v27 = vld [vmem:[%s0 + $0x30] sm:$0xff]
    %v28 = vld [vmem:[%s0 + $0x38] sm:$0xff]
    %v29 = vld [vmem:[%s0 + $0x40] sm:$0xff]
    %v30 = vld [vmem:[%s0 + $0x48] sm:$0xff]
    %v31 = vld [vmem:[%s0 + $0x50] sm:$0xff]
    %v32 = vld [vmem:[%s0 + $0x58] sm:$0xff]
    %v33 = vld [vmem:[%s0 + $0x60] sm:$0xff]
    %v34 = vld [vmem:[%s0 + $0x68] sm:$0xff]
    %v35 = vld [vmem:[%s0 + $0x70] sm:$0xff]
    %v36 = vld [vmem:[%s0 + $0x78] sm:$0xff]
    %v37 = vld [vmem:[%s0 + $0x80] sm:$0xff]
    %v38 = vld [vmem:[%s0 + $0x88] sm:$0xff]
    %v39 = vld [vmem:[%s0 + $0x90] sm:$0xff]
    %v40 = vld [vmem:[%s0 + $0x98] sm:$0xff]
    %v41 = vld [vmem:[%s0 + $0xa0] sm:$0xff]
    %v42 = vld [vmem:[%s0 + $0xa8] sm:$0xff]
    %v43 = vld [vmem:[%s0 + $0xb0] sm:$0xff]
    %v44 = vld [vmem:[%s0 + $0xb8] sm:$0xff]
    %v45 = vld [vmem:[%s0 + $0xc0] sm:$0xff]
    %v46 = vld [vmem:[%s0 + $0xc8] sm:$0xff]
    %v47 = vld [vmem:[%s0 + $0xd0] sm:$0xff]
    %v48 = vld [vmem:[%s0 + $0xd8] sm:$0xff]
    %v49 = vld [vmem:[%s0 + $0xe0] sm:$0xff]
    %v50 = vld [vmem:[%s0 + $0xe8] sm:$0xff]
    %v51 = vld [vmem:[%s0 + $0xf0] sm:$0xff]
    %v52 = vld [vmem:[%s0 + $0xf8] sm:$0xff]
    %v53 = vld [vmem:[%s4] sm:$0xff]
    %v54 = vld [vmem:[%s1] sm:$0xff]
    %v55 = vld [vmem:[%s1 + $0x8] sm:$0xff]
    %v56 = vld [vmem:[%s1 + $0x10] sm:$0xff]
    %v57 = vld [vmem:[%s1 + $0x18] sm:$0xff]
    %v58 = vlaneseq
    %v59 = vshrl.u32 %v58, 7
    %v60 = vsub.s32 0, %v59
    %v61 = vrot.slane %v53, %v60
    %vm62 = vcmask 261120
    %v64 = vsel %vm62, %v21, 0
    %v67 = vsel %vm62, %v22, 0
    %v70 = vsel %vm62, %v23, 0
    %v73 = vsel %vm62, %v24, 0
    %v76 = vsel %vm62, %v25, 0
    %v79 = vsel %vm62, %v26, 0
    %v82 = vsel %vm62, %v27, 0
    %v85 = vsel %vm62, %v28, 0
    %v88 = vsel %vm62, %v29, 0
    %v91 = vsel %vm62, %v30, 0
    %v94 = vsel %vm62, %v31, 0
    %v97 = vsel %vm62, %v32, 0
    %v100 = vsel %vm62, %v33, 0
    %v103 = vsel %vm62, %v34, 0
    %v106 = vsel %vm62, %v35, 0
    %v109 = vsel %vm62, %v36, 0
    %v112 = vsel %vm62, %v37, 0
    %v115 = vsel %vm62, %v38, 0
    %v118 = vsel %vm62, %v39, 0
    %v121 = vsel %vm62, %v40, 0
    %v124 = vsel %vm62, %v41, 0
    %v127 = vsel %vm62, %v42, 0
    %v130 = vsel %vm62, %v43, 0
    %v133 = vsel %vm62, %v44, 0
    %v136 = vsel %vm62, %v45, 0
    %v139 = vsel %vm62, %v46, 0
    %v142 = vsel %vm62, %v47, 0
    %v145 = vsel %vm62, %v48, 0
    %v148 = vsel %vm62, %v49, 0
    %v151 = vsel %vm62, %v50, 0
    %v154 = vsel %vm62, %v51, 0
    %v157 = vsel %vm62, %v52, 0
    %159 = vmatprep.subr.mxu0 0.0
    %160 = vmatpush1.msra.mxu0 0.0
    %161 = vmatprep.subr.mxu0 0.0
    %162 = vmatpush1.msra.mxu0 0.0
    %163 = vmatprep.subr.mxu0 0.0
    %164 = vmatpush1.msra.mxu0 0.0
    %165 = vmatprep.subr.mxu0 0.0
    %166 = vmatpush1.msra.mxu0 0.0
    %167 = vmatprep.subr.mxu0 0.0
    %168 = vmatpush1.msra.mxu0 0.0
    %169 = vmatprep.subr.mxu0 0.0
    %170 = vmatpush1.msra.mxu0 0.0
    %171 = vmatprep.subr.mxu0 0.0
    %172 = vmatpush1.msra.mxu0 0.0
    %173 = vmatprep.subr.mxu0 0.0
    %174 = vmatpush1.msra.mxu0 0.0
    %175 = vmatprep.subr.mxu0 0.0
    %176 = vmatpush1.msra.mxu0 0.0
    %177 = vmatprep.subr.mxu0 0.0
    %178 = vmatpush1.msra.mxu0 0.0
    %179 = vmatprep.subr.mxu0 0.0
    %180 = vmatpush1.msra.mxu0 0.0
    %181 = vmatprep.subr.mxu0 0.0
    %182 = vmatpush1.msra.mxu0 0.0
    %183 = vmatprep.subr.mxu0 0.0
    %184 = vmatpush1.msra.mxu0 %v57
    %185 = vmatprep.subr.mxu0 0.0
    %186 = vmatpush1.msra.mxu0 %v56
    %187 = vmatprep.subr.mxu0 0.0
    %188 = vmatpush1.msra.mxu0 %v55
    %189 = vmatprep.subr.mxu0 0.0
    %190 = vmatpush1.msra.mxu0 %v54
    %191 = vmatprep.subr.mxu0 0.0
    %192 = vmatpush2.msra.mxu0 0.0
    %193 = vmatprep.subr.mxu0 0.0
    %194 = vmatpush2.msra.mxu0 0.0
    %195 = vmatprep.subr.mxu0 0.0
    %196 = vmatpush2.msra.mxu0 0.0
    %197 = vmatprep.subr.mxu0 0.0
    %198 = vmatpush2.msra.mxu0 0.0
    %199 = vmatprep.subr.mxu0 0.0
    %200 = vmatpush2.msra.mxu0 0.0
    %201 = vmatprep.subr.mxu0 0.0
    %202 = vmatpush2.msra.mxu0 0.0
    %203 = vmatprep.subr.mxu0 0.0
    %204 = vmatpush2.msra.mxu0 0.0
    %205 = vmatprep.subr.mxu0 0.0
    %206 = vmatpush2.msra.mxu0 0.0
    %207 = vmatprep.subr.mxu0 0.0
    %208 = vmatpush2.msra.mxu0 0.0
    %209 = vmatprep.subr.mxu0 0.0
    %210 = vmatpush2.msra.mxu0 0.0
    %211 = vmatprep.subr.mxu0 0.0
    %212 = vmatpush2.msra.mxu0 0.0
    %213 = vmatprep.subr.mxu0 0.0
    %214 = vmatpush2.msra.mxu0 0.0
    %215 = vmatprep.subr.mxu0 0.0
    %216 = vmatpush2.msra.mxu0 0.0
    %217 = vmatprep.subr.mxu0 0.0
    %218 = vmatpush2.msra.mxu0 0.0
    %219 = vmatprep.subr.mxu0 0.0
    %220 = vmatpush2.msra.mxu0 0.0
    %221 = vmatprep.subr.mxu0 0.0
    %222 = vmatpush2.msra.mxu0 0.0
    %223 = vmatprep.mubr.f32.mxu0 0.0
    %224 = vmatmul.mubr.f32.gmra.mxu0 %v64
    %v225 = vpop.f32.mrf.mxu0
    %v226 = vadd.f32 %v61, %v225
    %v227 = vpop.f32.mrf.mxu0
    %228 = vmatprep.mubr.f32.mxu0 0.0
    %229 = vmatmul.mubr.f32.gmra.mxu0 %v67
    %v230 = vpop.f32.mrf.mxu0
    %v231 = vadd.f32 %v61, %v230
    %v232 = vpop.f32.mrf.mxu0
    %233 = vmatprep.mubr.f32.mxu0 0.0
    %234 = vmatmul.mubr.f32.gmra.mxu0 %v70
    %v235 = vpop.f32.mrf.mxu0
    %v236 = vadd.f32 %v61, %v235
    %v237 = vpop.f32.mrf.mxu0
    %238 = vmatprep.mubr.f32.mxu0 0.0
    %239 = vmatmul.mubr.f32.gmra.mxu0 %v73
    %v240 = vpop.f32.mrf.mxu0
    %v241 = vadd.f32 %v61, %v240
    %v242 = vpop.f32.mrf.mxu0
    %243 = vmatprep.mubr.f32.mxu0 0.0
    %244 = vmatmul.mubr.f32.gmra.mxu0 %v76
    %v245 = vpop.f32.mrf.mxu0
    %v246 = vadd.f32 %v61, %v245
    %v247 = vpop.f32.mrf.mxu0
    %248 = vmatprep.mubr.f32.mxu0 0.0
    %249 = vmatmul.mubr.f32.gmra.mxu0 %v79
    %v250 = vpop.f32.mrf.mxu0
    %v251 = vadd.f32 %v61, %v250
    %v252 = vpop.f32.mrf.mxu0
    %253 = vmatprep.mubr.f32.mxu0 0.0
    %254 = vmatmul.mubr.f32.gmra.mxu0 %v82
    %v255 = vpop.f32.mrf.mxu0
    %v256 = vadd.f32 %v61, %v255
    %v257 = vpop.f32.mrf.mxu0
    %258 = vmatprep.mubr.f32.mxu0 0.0
    %259 = vmatmul.mubr.f32.gmra.mxu0 %v85
    %v260 = vpop.f32.mrf.mxu0
    %v261 = vadd.f32 %v61, %v260
    %v262 = vpop.f32.mrf.mxu0
    %263 = vmatprep.mubr.f32.mxu0 0.0
    %264 = vmatmul.mubr.f32.gmra.mxu0 %v88
    %v265 = vpop.f32.mrf.mxu0
    %v266 = vadd.f32 %v61, %v265
    %v267 = vpop.f32.mrf.mxu0
    %268 = vmatprep.mubr.f32.mxu0 0.0
    %269 = vmatmul.mubr.f32.gmra.mxu0 %v91
    %v270 = vpop.f32.mrf.mxu0
    %v271 = vadd.f32 %v61, %v270
    %v272 = vpop.f32.mrf.mxu0
    %273 = vmatprep.mubr.f32.mxu0 0.0
    %274 = vmatmul.mubr.f32.gmra.mxu0 %v94
    %v275 = vpop.f32.mrf.mxu0
    %v276 = vadd.f32 %v61, %v275
    %v277 = vpop.f32.mrf.mxu0
    %278 = vmatprep.mubr.f32.mxu0 0.0
    %279 = vmatmul.mubr.f32.gmra.mxu0 %v97
    %v280 = vpop.f32.mrf.mxu0
    %v281 = vadd.f32 %v61, %v280
    %v282 = vpop.f32.mrf.mxu0
    %283 = vmatprep.mubr.f32.mxu0 0.0
    %284 = vmatmul.mubr.f32.gmra.mxu0 %v100
    %v285 = vpop.f32.mrf.mxu0
    %v286 = vadd.f32 %v61, %v285
    %v287 = vpop.f32.mrf.mxu0
    %288 = vmatprep.mubr.f32.mxu0 0.0
    %289 = vmatmul.mubr.f32.gmra.mxu0 %v103
    %v290 = vpop.f32.mrf.mxu0
    %v291 = vadd.f32 %v61, %v290
    %v292 = vpop.f32.mrf.mxu0
    %293 = vmatprep.mubr.f32.mxu0 0.0
    %294 = vmatmul.mubr.f32.gmra.mxu0 %v106
    %v295 = vpop.f32.mrf.mxu0
    %v296 = vadd.f32 %v61, %v295
    %v297 = vpop.f32.mrf.mxu0
    %298 = vmatprep.mubr.f32.mxu0 0.0
    %299 = vmatmul.mubr.f32.gmra.mxu0 %v109
    %v300 = vpop.f32.mrf.mxu0
    %v301 = vadd.f32 %v61, %v300
    %v302 = vpop.f32.mrf.mxu0
    %303 = vmatprep.mubr.f32.mxu0 0.0
    %304 = vmatmul.mubr.f32.gmra.mxu0 %v112
    %v305 = vpop.f32.mrf.mxu0
    %v306 = vadd.f32 %v61, %v305
    %v307 = vpop.f32.mrf.mxu0
    %308 = vmatprep.mubr.f32.mxu0 0.0
    %309 = vmatmul.mubr.f32.gmra.mxu0 %v115
    %v310 = vpop.f32.mrf.mxu0
    %v311 = vadd.f32 %v61, %v310
    %v312 = vpop.f32.mrf.mxu0
    %313 = vmatprep.mubr.f32.mxu0 0.0
    %314 = vmatmul.mubr.f32.gmra.mxu0 %v118
    %v315 = vpop.f32.mrf.mxu0
    %v316 = vadd.f32 %v61, %v315
    %v317 = vpop.f32.mrf.mxu0
    %318 = vmatprep.mubr.f32.mxu0 0.0
    %319 = vmatmul.mubr.f32.gmra.mxu0 %v121
    %v320 = vpop.f32.mrf.mxu0
    %v321 = vadd.f32 %v61, %v320
    %v322 = vpop.f32.mrf.mxu0
    %323 = vmatprep.mubr.f32.mxu0 0.0
    %324 = vmatmul.mubr.f32.gmra.mxu0 %v124
    %v325 = vpop.f32.mrf.mxu0
    %v326 = vadd.f32 %v61, %v325
    %v327 = vpop.f32.mrf.mxu0
    %328 = vmatprep.mubr.f32.mxu0 0.0
    %329 = vmatmul.mubr.f32.gmra.mxu0 %v127
    %v330 = vpop.f32.mrf.mxu0
    %v331 = vadd.f32 %v61, %v330
    %v332 = vpop.f32.mrf.mxu0
    %333 = vmatprep.mubr.f32.mxu0 0.0
    %334 = vmatmul.mubr.f32.gmra.mxu0 %v130
    %v335 = vpop.f32.mrf.mxu0
    %v336 = vadd.f32 %v61, %v335
    %v337 = vpop.f32.mrf.mxu0
    %338 = vmatprep.mubr.f32.mxu0 0.0
    %339 = vmatmul.mubr.f32.gmra.mxu0 %v133
    %v340 = vpop.f32.mrf.mxu0
    %v341 = vadd.f32 %v61, %v340
    %v342 = vpop.f32.mrf.mxu0
    %343 = vmatprep.mubr.f32.mxu0 0.0
    %344 = vmatmul.mubr.f32.gmra.mxu0 %v136
    %v345 = vpop.f32.mrf.mxu0
    %v346 = vadd.f32 %v61, %v345
    %v347 = vpop.f32.mrf.mxu0
    %348 = vmatprep.mubr.f32.mxu0 0.0
    %349 = vmatmul.mubr.f32.gmra.mxu0 %v139
    %v350 = vpop.f32.mrf.mxu0
    %v351 = vadd.f32 %v61, %v350
    %v352 = vpop.f32.mrf.mxu0
    %353 = vmatprep.mubr.f32.mxu0 0.0
    %354 = vmatmul.mubr.f32.gmra.mxu0 %v142
    %v355 = vpop.f32.mrf.mxu0
    %v356 = vadd.f32 %v61, %v355
    %v357 = vpop.f32.mrf.mxu0
    %358 = vmatprep.mubr.f32.mxu0 0.0
    %359 = vmatmul.mubr.f32.gmra.mxu0 %v145
    %v360 = vpop.f32.mrf.mxu0
    %v361 = vadd.f32 %v61, %v360
    %v362 = vpop.f32.mrf.mxu0
    %363 = vmatprep.mubr.f32.mxu0 0.0
    %364 = vmatmul.mubr.f32.gmra.mxu0 %v148
    %v365 = vpop.f32.mrf.mxu0
    %v366 = vadd.f32 %v61, %v365
    %v367 = vpop.f32.mrf.mxu0
    %368 = vmatprep.mubr.f32.mxu0 0.0
    %369 = vmatmul.mubr.f32.gmra.mxu0 %v151
    %v370 = vpop.f32.mrf.mxu0
    %v371 = vadd.f32 %v61, %v370
    %v372 = vpop.f32.mrf.mxu0
    %373 = vmatprep.mubr.f32.mxu0 0.0
    %374 = vmatmul.mubr.f32.gmra.mxu0 %v154
    %v375 = vpop.f32.mrf.mxu0
    %v376 = vadd.f32 %v61, %v375
    %v377 = vpop.f32.mrf.mxu0
    %378 = vmatprep.mubr.f32.mxu0 0.0
    %379 = vmatmul.mubr.f32.gmra.mxu0 %v157
    %v380 = vpop.f32.mrf.mxu0
    %v381 = vadd.f32 %v61, %v380
    %v382 = vpop.f32.mrf.mxu0
    %383 = vdwg.mxu0
    %v384 = vsel %vm62, %v226, 0.0
    %385 = vadd.xlane.f32.xlu0 %v384
    %v386 = vpop.xlane.xlu0 %385
    %v387 = vsel %vm62, %v231, 0.0
    %388 = vadd.xlane.f32.xlu0 %v387
    %v389 = vpop.xlane.xlu0 %388
    %v390 = vsel %vm62, %v236, 0.0
    %391 = vadd.xlane.f32.xlu0 %v390
    %v392 = vpop.xlane.xlu0 %391
    %v393 = vsel %vm62, %v241, 0.0
    %394 = vadd.xlane.f32.xlu0 %v393
    %v395 = vpop.xlane.xlu0 %394
    %v396 = vsel %vm62, %v246, 0.0
    %397 = vadd.xlane.f32.xlu0 %v396
    %v398 = vpop.xlane.xlu0 %397
    %v399 = vsel %vm62, %v251, 0.0
    %400 = vadd.xlane.f32.xlu0 %v399
    %v401 = vpop.xlane.xlu0 %400
    %v402 = vsel %vm62, %v256, 0.0
    %403 = vadd.xlane.f32.xlu0 %v402
    %v404 = vpop.xlane.xlu0 %403
    %v405 = vsel %vm62, %v261, 0.0
    %406 = vadd.xlane.f32.xlu0 %v405
    %v407 = vpop.xlane.xlu0 %406
    %v408 = vsel %vm62, %v266, 0.0
    %409 = vadd.xlane.f32.xlu0 %v408
    %v410 = vpop.xlane.xlu0 %409
    %v411 = vsel %vm62, %v271, 0.0
    %412 = vadd.xlane.f32.xlu0 %v411
    %v413 = vpop.xlane.xlu0 %412
    %v414 = vsel %vm62, %v276, 0.0
    %415 = vadd.xlane.f32.xlu0 %v414
    %v416 = vpop.xlane.xlu0 %415
    %v417 = vsel %vm62, %v281, 0.0
    %418 = vadd.xlane.f32.xlu0 %v417
    %v419 = vpop.xlane.xlu0 %418
    %v420 = vsel %vm62, %v286, 0.0
    %421 = vadd.xlane.f32.xlu0 %v420
    %v422 = vpop.xlane.xlu0 %421
    %v423 = vsel %vm62, %v291, 0.0
    %424 = vadd.xlane.f32.xlu0 %v423
    %v425 = vpop.xlane.xlu0 %424
    %v426 = vsel %vm62, %v296, 0.0
    %427 = vadd.xlane.f32.xlu0 %v426
    %v428 = vpop.xlane.xlu0 %427
    %v429 = vsel %vm62, %v301, 0.0
    %430 = vadd.xlane.f32.xlu0 %v429
    %v431 = vpop.xlane.xlu0 %430
    %v432 = vsel %vm62, %v306, 0.0
    %433 = vadd.xlane.f32.xlu0 %v432
    %v434 = vpop.xlane.xlu0 %433
    %v435 = vsel %vm62, %v311, 0.0
    %436 = vadd.xlane.f32.xlu0 %v435
    %v437 = vpop.xlane.xlu0 %436
    %v438 = vsel %vm62, %v316, 0.0
    %439 = vadd.xlane.f32.xlu0 %v438
    %v440 = vpop.xlane.xlu0 %439
    %v441 = vsel %vm62, %v321, 0.0
    %442 = vadd.xlane.f32.xlu0 %v441
    %v443 = vpop.xlane.xlu0 %442
    %v444 = vsel %vm62, %v326, 0.0
    %445 = vadd.xlane.f32.xlu0 %v444
    %v446 = vpop.xlane.xlu0 %445
    %v447 = vsel %vm62, %v331, 0.0
    %448 = vadd.xlane.f32.xlu0 %v447
    %v449 = vpop.xlane.xlu0 %448
    %v450 = vsel %vm62, %v336, 0.0
    %451 = vadd.xlane.f32.xlu0 %v450
    %v452 = vpop.xlane.xlu0 %451
    %v453 = vsel %vm62, %v341, 0.0
    %454 = vadd.xlane.f32.xlu0 %v453
    %v455 = vpop.xlane.xlu0 %454
    %v456 = vsel %vm62, %v346, 0.0
    %457 = vadd.xlane.f32.xlu0 %v456
    %v458 = vpop.xlane.xlu0 %457
    %v459 = vsel %vm62, %v351, 0.0
    %460 = vadd.xlane.f32.xlu0 %v459
    %v461 = vpop.xlane.xlu0 %460
    %v462 = vsel %vm62, %v356, 0.0
    %463 = vadd.xlane.f32.xlu0 %v462
    %v464 = vpop.xlane.xlu0 %463
    %v465 = vsel %vm62, %v361, 0.0
    %466 = vadd.xlane.f32.xlu0 %v465
    %v467 = vpop.xlane.xlu0 %466
    %v468 = vsel %vm62, %v366, 0.0
    %469 = vadd.xlane.f32.xlu0 %v468
    %v470 = vpop.xlane.xlu0 %469
    %v471 = vsel %vm62, %v371, 0.0
    %472 = vadd.xlane.f32.xlu0 %v471
    %v473 = vpop.xlane.xlu0 %472
    %v474 = vsel %vm62, %v376, 0.0
    %475 = vadd.xlane.f32.xlu0 %v474
    %v476 = vpop.xlane.xlu0 %475
    %v477 = vsel %vm62, %v381, 0.0
    %478 = vadd.xlane.f32.xlu0 %v477
    %v479 = vpop.xlane.xlu0 %478
    %v480 = vrcp.pop 32.0
    %v481 = vmul.f32 %v386, %v480
    %v482 = vmul.f32 %v389, %v480
    %v483 = vmul.f32 %v392, %v480
    %v484 = vmul.f32 %v395, %v480
    %v485 = vmul.f32 %v398, %v480
    %v486 = vmul.f32 %v401, %v480
    %v487 = vmul.f32 %v404, %v480
    %v488 = vmul.f32 %v407, %v480
    %v489 = vmul.f32 %v410, %v480
    %v490 = vmul.f32 %v413, %v480
    %v491 = vmul.f32 %v416, %v480
    %v492 = vmul.f32 %v419, %v480
    %v493 = vmul.f32 %v422, %v480
    %v494 = vmul.f32 %v425, %v480
    %v495 = vmul.f32 %v428, %v480
    %v496 = vmul.f32 %v431, %v480
    %v497 = vmul.f32 %v434, %v480
    %v498 = vmul.f32 %v437, %v480
    %v499 = vmul.f32 %v440, %v480
    %v500 = vmul.f32 %v443, %v480
    %v501 = vmul.f32 %v446, %v480
    %v502 = vmul.f32 %v449, %v480
    %v503 = vmul.f32 %v452, %v480
    %v504 = vmul.f32 %v455, %v480
    %v505 = vmul.f32 %v458, %v480
    %v506 = vmul.f32 %v461, %v480
    %v507 = vmul.f32 %v464, %v480
    %v508 = vmul.f32 %v467, %v480
    %v509 = vmul.f32 %v470, %v480
    %v510 = vmul.f32 %v473, %v480
    %v511 = vmul.f32 %v476, %v480
    %v512 = vmul.f32 %v479, %v480
    %v513 = vsub.f32 %v226, %v481
    %v514 = vsub.f32 %v231, %v482
    %v515 = vsub.f32 %v236, %v483
    %v516 = vsub.f32 %v241, %v484
    %v517 = vsub.f32 %v246, %v485
    %v518 = vsub.f32 %v251, %v486
    %v519 = vsub.f32 %v256, %v487
    %v520 = vsub.f32 %v261, %v488
    %v521 = vsub.f32 %v266, %v489
    %v522 = vsub.f32 %v271, %v490
    %v523 = vsub.f32 %v276, %v491
    %v524 = vsub.f32 %v281, %v492
    %v525 = vsub.f32 %v286, %v493
    %v526 = vsub.f32 %v291, %v494
    %v527 = vsub.f32 %v296, %v495
    %v528 = vsub.f32 %v301, %v496
    %v529 = vsub.f32 %v306, %v497
    %v530 = vsub.f32 %v311, %v498
    %v531 = vsub.f32 %v316, %v499
    %v532 = vsub.f32 %v321, %v500
    %v533 = vsub.f32 %v326, %v501
    %v534 = vsub.f32 %v331, %v502
    %v535 = vsub.f32 %v336, %v503
    %v536 = vsub.f32 %v341, %v504
    %v537 = vsub.f32 %v346, %v505
    %v538 = vsub.f32 %v351, %v506
    %v539 = vsub.f32 %v356, %v507
    %v540 = vsub.f32 %v361, %v508
    %v541 = vsub.f32 %v366, %v509
    %v542 = vsub.f32 %v371, %v510
    %v543 = vsub.f32 %v376, %v511
    %v544 = vsub.f32 %v381, %v512
    %v545 = vmul.f32 %v513, %v513
    %v546 = vmul.f32 %v514, %v514
    %v547 = vmul.f32 %v515, %v515
    %v548 = vmul.f32 %v516, %v516
    %v549 = vmul.f32 %v517, %v517
    %v550 = vmul.f32 %v518, %v518
    %v551 = vmul.f32 %v519, %v519
    %v552 = vmul.f32 %v520, %v520
    %v553 = vmul.f32 %v521, %v521
    %v554 = vmul.f32 %v522, %v522
    %v555 = vmul.f32 %v523, %v523
    %v556 = vmul.f32 %v524, %v524
    %v557 = vmul.f32 %v525, %v525
    %v558 = vmul.f32 %v526, %v526
    %v559 = vmul.f32 %v527, %v527
    %v560 = vmul.f32 %v528, %v528
    %v561 = vmul.f32 %v529, %v529
    %v562 = vmul.f32 %v530, %v530
    %v563 = vmul.f32 %v531, %v531
    %v564 = vmul.f32 %v532, %v532
    %v565 = vmul.f32 %v533, %v533
    %v566 = vmul.f32 %v534, %v534
    %v567 = vmul.f32 %v535, %v535
    %v568 = vmul.f32 %v536, %v536
    %v569 = vmul.f32 %v537, %v537
    %v570 = vmul.f32 %v538, %v538
    %v571 = vmul.f32 %v539, %v539
    %v572 = vmul.f32 %v540, %v540
    %v573 = vmul.f32 %v541, %v541
    %v574 = vmul.f32 %v542, %v542
    %v575 = vmul.f32 %v543, %v543
    %v576 = vmul.f32 %v544, %v544
    %v577 = vsel %vm62, %v545, 0.0
    %578 = vadd.xlane.f32.xlu0 %v577
    %v579 = vpop.xlane.xlu0 %578
    %v580 = vsel %vm62, %v546, 0.0
    %581 = vadd.xlane.f32.xlu0 %v580
    %v582 = vpop.xlane.xlu0 %581
    %v583 = vsel %vm62, %v547, 0.0
    %584 = vadd.xlane.f32.xlu0 %v583
    %v585 = vpop.xlane.xlu0 %584
    %v586 = vsel %vm62, %v548, 0.0
    %587 = vadd.xlane.f32.xlu0 %v586
    %v588 = vpop.xlane.xlu0 %587
    %v589 = vsel %vm62, %v549, 0.0
    %590 = vadd.xlane.f32.xlu0 %v589
    %v591 = vpop.xlane.xlu0 %590
    %v592 = vsel %vm62, %v550, 0.0
    %593 = vadd.xlane.f32.xlu0 %v592
    %v594 = vpop.xlane.xlu0 %593
    %v595 = vsel %vm62, %v551, 0.0
    %596 = vadd.xlane.f32.xlu0 %v595
    %v597 = vpop.xlane.xlu0 %596
    %v598 = vsel %vm62, %v552, 0.0
    %599 = vadd.xlane.f32.xlu0 %v598
    %v600 = vpop.xlane.xlu0 %599
    %v601 = vsel %vm62, %v553, 0.0
    %602 = vadd.xlane.f32.xlu0 %v601
    %v603 = vpop.xlane.xlu0 %602
    %v604 = vsel %vm62, %v554, 0.0
    %605 = vadd.xlane.f32.xlu0 %v604
    %v606 = vpop.xlane.xlu0 %605
    %v607 = vsel %vm62, %v555, 0.0
    %608 = vadd.xlane.f32.xlu0 %v607
    %v609 = vpop.xlane.xlu0 %608
    %v610 = vsel %vm62, %v556, 0.0
    %611 = vadd.xlane.f32.xlu0 %v610
    %v612 = vpop.xlane.xlu0 %611
    %v613 = vsel %vm62, %v557, 0.0
    %614 = vadd.xlane.f32.xlu0 %v613
    %v615 = vpop.xlane.xlu0 %614
    %v616 = vsel %vm62, %v558, 0.0
    %617 = vadd.xlane.f32.xlu0 %v616
    %v618 = vpop.xlane.xlu0 %617
    %v619 = vsel %vm62, %v559, 0.0
    %620 = vadd.xlane.f32.xlu0 %v619
    %v621 = vpop.xlane.xlu0 %620
    %v622 = vsel %vm62, %v560, 0.0
    %623 = vadd.xlane.f32.xlu0 %v622
    %v624 = vpop.xlane.xlu0 %623
    %v625 = vsel %vm62, %v561, 0.0
    %626 = vadd.xlane.f32.xlu0 %v625
    %v627 = vpop.xlane.xlu0 %626
    %v628 = vsel %vm62, %v562, 0.0
    %629 = vadd.xlane.f32.xlu0 %v628
    %v630 = vpop.xlane.xlu0 %629
    %v631 = vsel %vm62, %v563, 0.0
    %632 = vadd.xlane.f32.xlu0 %v631
    %v633 = vpop.xlane.xlu0 %632
    %v634 = vsel %vm62, %v564, 0.0
    %635 = vadd.xlane.f32.xlu0 %v634
    %v636 = vpop.xlane.xlu0 %635
    %v637 = vsel %vm62, %v565, 0.0
    %638 = vadd.xlane.f32.xlu0 %v637
    %v639 = vpop.xlane.xlu0 %638
    %v640 = vsel %vm62, %v566, 0.0
    %641 = vadd.xlane.f32.xlu0 %v640
    %v642 = vpop.xlane.xlu0 %641
    %v643 = vsel %vm62, %v567, 0.0
    %644 = vadd.xlane.f32.xlu0 %v643
    %v645 = vpop.xlane.xlu0 %644
    %v646 = vsel %vm62, %v568, 0.0
    %647 = vadd.xlane.f32.xlu0 %v646
    %v648 = vpop.xlane.xlu0 %647
    %v649 = vsel %vm62, %v569, 0.0
    %650 = vadd.xlane.f32.xlu0 %v649
    %v651 = vpop.xlane.xlu0 %650
    %v652 = vsel %vm62, %v570, 0.0
    %653 = vadd.xlane.f32.xlu0 %v652
    %v654 = vpop.xlane.xlu0 %653
    %v655 = vsel %vm62, %v571, 0.0
    %656 = vadd.xlane.f32.xlu0 %v655
    %v657 = vpop.xlane.xlu0 %656
    %v658 = vsel %vm62, %v572, 0.0
    %659 = vadd.xlane.f32.xlu0 %v658
    %v660 = vpop.xlane.xlu0 %659
    %v661 = vsel %vm62, %v573, 0.0
    %662 = vadd.xlane.f32.xlu0 %v661
    %v663 = vpop.xlane.xlu0 %662
    %v664 = vsel %vm62, %v574, 0.0
    %665 = vadd.xlane.f32.xlu0 %v664
    %v666 = vpop.xlane.xlu0 %665
    %v667 = vsel %vm62, %v575, 0.0
    %668 = vadd.xlane.f32.xlu0 %v667
    %v669 = vpop.xlane.xlu0 %668
    %v670 = vsel %vm62, %v576, 0.0
    %671 = vadd.xlane.f32.xlu0 %v670
    %v672 = vpop.xlane.xlu0 %671
    %v673 = vmul.f32 %v579, %v480
    %v674 = vmul.f32 %v582, %v480
    %v675 = vmul.f32 %v585, %v480
    %v676 = vmul.f32 %v588, %v480
    %v677 = vmul.f32 %v591, %v480
    %v678 = vmul.f32 %v594, %v480
    %v679 = vmul.f32 %v597, %v480
    %v680 = vmul.f32 %v600, %v480
    %v681 = vmul.f32 %v603, %v480
    %v682 = vmul.f32 %v606, %v480
    %v683 = vmul.f32 %v609, %v480
    %v684 = vmul.f32 %v612, %v480
    %v685 = vmul.f32 %v615, %v480
    %v686 = vmul.f32 %v618, %v480
    %v687 = vmul.f32 %v621, %v480
    %v688 = vmul.f32 %v624, %v480
    %v689 = vmul.f32 %v627, %v480
    %v690 = vmul.f32 %v630, %v480
    %v691 = vmul.f32 %v633, %v480
    %v692 = vmul.f32 %v636, %v480
    %v693 = vmul.f32 %v639, %v480
    %v694 = vmul.f32 %v642, %v480
    %v695 = vmul.f32 %v645, %v480
    %v696 = vmul.f32 %v648, %v480
    %v697 = vmul.f32 %v651, %v480
    %v698 = vmul.f32 %v654, %v480
    %v699 = vmul.f32 %v657, %v480
    %v700 = vmul.f32 %v660, %v480
    %v701 = vmul.f32 %v663, %v480
    %v702 = vmul.f32 %v666, %v480
    %v703 = vmul.f32 %v669, %v480
    %v704 = vmul.f32 %v672, %v480
    %v705 = vadd.f32 %v673, 1e-05
    %v706 = vadd.f32 %v674, 1e-05
    %v707 = vadd.f32 %v675, 1e-05
    %v708 = vadd.f32 %v676, 1e-05
    %v709 = vadd.f32 %v677, 1e-05
    %v710 = vadd.f32 %v678, 1e-05
    %v711 = vadd.f32 %v679, 1e-05
    %v712 = vadd.f32 %v680, 1e-05
    %v713 = vadd.f32 %v681, 1e-05
    %v714 = vadd.f32 %v682, 1e-05
    %v715 = vadd.f32 %v683, 1e-05
    %v716 = vadd.f32 %v684, 1e-05
    %v717 = vadd.f32 %v685, 1e-05
    %v718 = vadd.f32 %v686, 1e-05
    %v719 = vadd.f32 %v687, 1e-05
    %v720 = vadd.f32 %v688, 1e-05
    %v721 = vadd.f32 %v689, 1e-05
    %v722 = vadd.f32 %v690, 1e-05
    %v723 = vadd.f32 %v691, 1e-05
    %v724 = vadd.f32 %v692, 1e-05
    %v725 = vadd.f32 %v693, 1e-05
    %v726 = vadd.f32 %v694, 1e-05
    %v727 = vadd.f32 %v695, 1e-05
    %v728 = vadd.f32 %v696, 1e-05
    %v729 = vadd.f32 %v697, 1e-05
    %v730 = vadd.f32 %v698, 1e-05
    %v731 = vadd.f32 %v699, 1e-05
    %v732 = vadd.f32 %v700, 1e-05
    %v733 = vadd.f32 %v701, 1e-05
    %v734 = vadd.f32 %v702, 1e-05
    %v735 = vadd.f32 %v703, 1e-05
    %v736 = vadd.f32 %v704, 1e-05
    %v737 = vrsqrt.pop %v705
    %v738 = vrsqrt.pop %v706
    %v739 = vrsqrt.pop %v707
    %v740 = vrsqrt.pop %v708
    %v741 = vrsqrt.pop %v709
    %v742 = vrsqrt.pop %v710
    %v743 = vrsqrt.pop %v711
    %v744 = vrsqrt.pop %v712
    %v745 = vrsqrt.pop %v713
    %v746 = vrsqrt.pop %v714
    %v747 = vrsqrt.pop %v715
    %v748 = vrsqrt.pop %v716
    %v749 = vrsqrt.pop %v717
    %v750 = vrsqrt.pop %v718
    %v751 = vrsqrt.pop %v719
    %v752 = vrsqrt.pop %v720
    %v753 = vrsqrt.pop %v721
    %v754 = vrsqrt.pop %v722
    %v755 = vrsqrt.pop %v723
    %v756 = vrsqrt.pop %v724
    %v757 = vrsqrt.pop %v725
    %v758 = vrsqrt.pop %v726
    %v759 = vrsqrt.pop %v727
    %v760 = vrsqrt.pop %v728
    %v761 = vrsqrt.pop %v729
    %v762 = vrsqrt.pop %v730
    %v763 = vrsqrt.pop %v731
    %v764 = vrsqrt.pop %v732
    %v765 = vrsqrt.pop %v733
    %v766 = vrsqrt.pop %v734
    %v767 = vrsqrt.pop %v735
    %v768 = vrsqrt.pop %v736
    %v769 = vmul.f32 %v513, %v737
    %v770 = vmul.f32 %v514, %v738
    %v771 = vmul.f32 %v515, %v739
    %v772 = vmul.f32 %v516, %v740
    %v773 = vmul.f32 %v517, %v741
    %v774 = vmul.f32 %v518, %v742
    %v775 = vmul.f32 %v519, %v743
    %v776 = vmul.f32 %v520, %v744
    %v777 = vmul.f32 %v521, %v745
    %v778 = vmul.f32 %v522, %v746
    %v779 = vmul.f32 %v523, %v747
    %v780 = vmul.f32 %v524, %v748
    %v781 = vmul.f32 %v525, %v749
    %v782 = vmul.f32 %v526, %v750
    %v783 = vmul.f32 %v527, %v751
    %v784 = vmul.f32 %v528, %v752
    %v785 = vmul.f32 %v529, %v753
    %v786 = vmul.f32 %v530, %v754
    %v787 = vmul.f32 %v531, %v755
    %v788 = vmul.f32 %v532, %v756
    %v789 = vmul.f32 %v533, %v757
    %v790 = vmul.f32 %v534, %v758
    %v791 = vmul.f32 %v535, %v759
    %v792 = vmul.f32 %v536, %v760
    %v793 = vmul.f32 %v537, %v761
    %v794 = vmul.f32 %v538, %v762
    %v795 = vmul.f32 %v539, %v763
    %v796 = vmul.f32 %v540, %v764
    %v797 = vmul.f32 %v541, %v765
    %v798 = vmul.f32 %v542, %v766
    %v799 = vmul.f32 %v543, %v767
    %v800 = vmul.f32 %v544, %v768
    %v801 = vlaneseq
    %v802 = vshrl.u32 %v801, 7
    %v803 = vsub.s32 1, %v802
    %v804 = vrot.slane %v53, %v803
    %v805 = vmul.f32 %v769, %v804
    %v806 = vmul.f32 %v770, %v804
    %v807 = vmul.f32 %v771, %v804
    %v808 = vmul.f32 %v772, %v804
    %v809 = vmul.f32 %v773, %v804
    %v810 = vmul.f32 %v774, %v804
    %v811 = vmul.f32 %v775, %v804
    %v812 = vmul.f32 %v776, %v804
    %v813 = vmul.f32 %v777, %v804
    %v814 = vmul.f32 %v778, %v804
    %v815 = vmul.f32 %v779, %v804
    %v816 = vmul.f32 %v780, %v804
    %v817 = vmul.f32 %v781, %v804
    %v818 = vmul.f32 %v782, %v804
    %v819 = vmul.f32 %v783, %v804
    %v820 = vmul.f32 %v784, %v804
    %v821 = vmul.f32 %v785, %v804
    %v822 = vmul.f32 %v786, %v804
    %v823 = vmul.f32 %v787, %v804
    %v824 = vmul.f32 %v788, %v804
    %v825 = vmul.f32 %v789, %v804
    %v826 = vmul.f32 %v790, %v804
    %v827 = vmul.f32 %v791, %v804
    %v828 = vmul.f32 %v792, %v804
    %v829 = vmul.f32 %v793, %v804
    %v830 = vmul.f32 %v794, %v804
    %v831 = vmul.f32 %v795, %v804
    %v832 = vmul.f32 %v796, %v804
    %v833 = vmul.f32 %v797, %v804
    %v834 = vmul.f32 %v798, %v804
    %v835 = vmul.f32 %v799, %v804
    %v836 = vmul.f32 %v800, %v804
    %v837 = vlaneseq
    %v838 = vshrl.u32 %v837, 7
    %v839 = vsub.s32 2, %v838
    %v840 = vrot.slane %v53, %v839
    %v841 = vadd.f32 %v805, %v840
    %v842 = vadd.f32 %v806, %v840
    %v843 = vadd.f32 %v807, %v840
    %v844 = vadd.f32 %v808, %v840
    %v845 = vadd.f32 %v809, %v840
    %v846 = vadd.f32 %v810, %v840
    %v847 = vadd.f32 %v811, %v840
    %v848 = vadd.f32 %v812, %v840
    %v849 = vadd.f32 %v813, %v840
    %v850 = vadd.f32 %v814, %v840
    %v851 = vadd.f32 %v815, %v840
    %v852 = vadd.f32 %v816, %v840
    %v853 = vadd.f32 %v817, %v840
    %v854 = vadd.f32 %v818, %v840
    %v855 = vadd.f32 %v819, %v840
    %v856 = vadd.f32 %v820, %v840
    %v857 = vadd.f32 %v821, %v840
    %v858 = vadd.f32 %v822, %v840
    %v859 = vadd.f32 %v823, %v840
    %v860 = vadd.f32 %v824, %v840
    %v861 = vadd.f32 %v825, %v840
    %v862 = vadd.f32 %v826, %v840
    %v863 = vadd.f32 %v827, %v840
    %v864 = vadd.f32 %v828, %v840
    %v865 = vadd.f32 %v829, %v840
    %v866 = vadd.f32 %v830, %v840
    %v867 = vadd.f32 %v831, %v840
    %v868 = vadd.f32 %v832, %v840
    %v869 = vadd.f32 %v833, %v840
    %v870 = vadd.f32 %v834, %v840
    %v871 = vadd.f32 %v835, %v840
    %v872 = vadd.f32 %v836, %v840
    %905 = vrot.lane.b32.xlu0 %v226, 96
    %v906 = vpop.permute.xlu0 %905
    %907 = vrot.lane.b32.xlu0 %v231, 96
    %v908 = vpop.permute.xlu0 %907
    %909 = vrot.lane.b32.xlu0 %v236, 96
    %v910 = vpop.permute.xlu0 %909
    %911 = vrot.lane.b32.xlu0 %v241, 96
    %v912 = vpop.permute.xlu0 %911
    %913 = vrot.lane.b32.xlu0 %v246, 96
    %v914 = vpop.permute.xlu0 %913
    %915 = vrot.lane.b32.xlu0 %v251, 96
    %v916 = vpop.permute.xlu0 %915
    %917 = vrot.lane.b32.xlu0 %v256, 96
    %v918 = vpop.permute.xlu0 %917
    %919 = vrot.lane.b32.xlu0 %v261, 96
    %v920 = vpop.permute.xlu0 %919
    %921 = vrot.lane.b32.xlu0 %v266, 96
    %v922 = vpop.permute.xlu0 %921
    %923 = vrot.lane.b32.xlu0 %v271, 96
    %v924 = vpop.permute.xlu0 %923
    %925 = vrot.lane.b32.xlu0 %v276, 96
    %v926 = vpop.permute.xlu0 %925
    %927 = vrot.lane.b32.xlu0 %v281, 96
    %v928 = vpop.permute.xlu0 %927
    %929 = vrot.lane.b32.xlu0 %v286, 96
    %v930 = vpop.permute.xlu0 %929
    %931 = vrot.lane.b32.xlu0 %v291, 96
    %v932 = vpop.permute.xlu0 %931
    %933 = vrot.lane.b32.xlu0 %v296, 96
    %v934 = vpop.permute.xlu0 %933
    %935 = vrot.lane.b32.xlu0 %v301, 96
    %v936 = vpop.permute.xlu0 %935
    %937 = vrot.lane.b32.xlu0 %v306, 96
    %v938 = vpop.permute.xlu0 %937
    %939 = vrot.lane.b32.xlu0 %v311, 96
    %v940 = vpop.permute.xlu0 %939
    %941 = vrot.lane.b32.xlu0 %v316, 96
    %v942 = vpop.permute.xlu0 %941
    %943 = vrot.lane.b32.xlu0 %v321, 96
    %v944 = vpop.permute.xlu0 %943
    %945 = vrot.lane.b32.xlu0 %v326, 96
    %v946 = vpop.permute.xlu0 %945
    %947 = vrot.lane.b32.xlu0 %v331, 96
    %v948 = vpop.permute.xlu0 %947
    %949 = vrot.lane.b32.xlu0 %v336, 96
    %v950 = vpop.permute.xlu0 %949
    %951 = vrot.lane.b32.xlu0 %v341, 96
    %v952 = vpop.permute.xlu0 %951
    %953 = vrot.lane.b32.xlu0 %v346, 96
    %v954 = vpop.permute.xlu0 %953
    %955 = vrot.lane.b32.xlu0 %v351, 96
    %v956 = vpop.permute.xlu0 %955
    %957 = vrot.lane.b32.xlu0 %v356, 96
    %v958 = vpop.permute.xlu0 %957
    %959 = vrot.lane.b32.xlu0 %v361, 96
    %v960 = vpop.permute.xlu0 %959
    %961 = vrot.lane.b32.xlu0 %v366, 96
    %v962 = vpop.permute.xlu0 %961
    %963 = vrot.lane.b32.xlu0 %v371, 96
    %v964 = vpop.permute.xlu0 %963
    %965 = vrot.lane.b32.xlu0 %v376, 96
    %v966 = vpop.permute.xlu0 %965
    %967 = vrot.lane.b32.xlu0 %v381, 96
    %v968 = vpop.permute.xlu0 %967
    %v1001 = vsel %vm62, %v906, 0.0
    %1002 = vadd.xlane.f32.xlu0 %v1001
    %v1003 = vpop.xlane.xlu0 %1002
    %v1004 = vsel %vm62, %v908, 0.0
    %1005 = vadd.xlane.f32.xlu0 %v1004
    %v1006 = vpop.xlane.xlu0 %1005
    %v1007 = vsel %vm62, %v910, 0.0
    %1008 = vadd.xlane.f32.xlu0 %v1007
    %v1009 = vpop.xlane.xlu0 %1008
    %v1010 = vsel %vm62, %v912, 0.0
    %1011 = vadd.xlane.f32.xlu0 %v1010
    %v1012 = vpop.xlane.xlu0 %1011
    %v1013 = vsel %vm62, %v914, 0.0
    %1014 = vadd.xlane.f32.xlu0 %v1013
    %v1015 = vpop.xlane.xlu0 %1014
    %v1016 = vsel %vm62, %v916, 0.0
    %1017 = vadd.xlane.f32.xlu0 %v1016
    %v1018 = vpop.xlane.xlu0 %1017
    %v1019 = vsel %vm62, %v918, 0.0
    %1020 = vadd.xlane.f32.xlu0 %v1019
    %v1021 = vpop.xlane.xlu0 %1020
    %v1022 = vsel %vm62, %v920, 0.0
    %1023 = vadd.xlane.f32.xlu0 %v1022
    %v1024 = vpop.xlane.xlu0 %1023
    %v1025 = vsel %vm62, %v922, 0.0
    %1026 = vadd.xlane.f32.xlu0 %v1025
    %v1027 = vpop.xlane.xlu0 %1026
    %v1028 = vsel %vm62, %v924, 0.0
    %1029 = vadd.xlane.f32.xlu0 %v1028
    %v1030 = vpop.xlane.xlu0 %1029
    %v1031 = vsel %vm62, %v926, 0.0
    %1032 = vadd.xlane.f32.xlu0 %v1031
    %v1033 = vpop.xlane.xlu0 %1032
    %v1034 = vsel %vm62, %v928, 0.0
    %1035 = vadd.xlane.f32.xlu0 %v1034
    %v1036 = vpop.xlane.xlu0 %1035
    %v1037 = vsel %vm62, %v930, 0.0
    %1038 = vadd.xlane.f32.xlu0 %v1037
    %v1039 = vpop.xlane.xlu0 %1038
    %v1040 = vsel %vm62, %v932, 0.0
    %1041 = vadd.xlane.f32.xlu0 %v1040
    %v1042 = vpop.xlane.xlu0 %1041
    %v1043 = vsel %vm62, %v934, 0.0
    %1044 = vadd.xlane.f32.xlu0 %v1043
    %v1045 = vpop.xlane.xlu0 %1044
    %v1046 = vsel %vm62, %v936, 0.0
    %1047 = vadd.xlane.f32.xlu0 %v1046
    %v1048 = vpop.xlane.xlu0 %1047
    %v1049 = vsel %vm62, %v938, 0.0
    %1050 = vadd.xlane.f32.xlu0 %v1049
    %v1051 = vpop.xlane.xlu0 %1050
    %v1052 = vsel %vm62, %v940, 0.0
    %1053 = vadd.xlane.f32.xlu0 %v1052
    %v1054 = vpop.xlane.xlu0 %1053
    %v1055 = vsel %vm62, %v942, 0.0
    %1056 = vadd.xlane.f32.xlu0 %v1055
    %v1057 = vpop.xlane.xlu0 %1056
    %v1058 = vsel %vm62, %v944, 0.0
    %1059 = vadd.xlane.f32.xlu0 %v1058
    %v1060 = vpop.xlane.xlu0 %1059
    %v1061 = vsel %vm62, %v946, 0.0
    %1062 = vadd.xlane.f32.xlu0 %v1061
    %v1063 = vpop.xlane.xlu0 %1062
    %v1064 = vsel %vm62, %v948, 0.0
    %1065 = vadd.xlane.f32.xlu0 %v1064
    %v1066 = vpop.xlane.xlu0 %1065
    %v1067 = vsel %vm62, %v950, 0.0
    %1068 = vadd.xlane.f32.xlu0 %v1067
    %v1069 = vpop.xlane.xlu0 %1068
    %v1070 = vsel %vm62, %v952, 0.0
    %1071 = vadd.xlane.f32.xlu0 %v1070
    %v1072 = vpop.xlane.xlu0 %1071
    %v1073 = vsel %vm62, %v954, 0.0
    %1074 = vadd.xlane.f32.xlu0 %v1073
    %v1075 = vpop.xlane.xlu0 %1074
    %v1076 = vsel %vm62, %v956, 0.0
    %1077 = vadd.xlane.f32.xlu0 %v1076
    %v1078 = vpop.xlane.xlu0 %1077
    %v1079 = vsel %vm62, %v958, 0.0
    %1080 = vadd.xlane.f32.xlu0 %v1079
    %v1081 = vpop.xlane.xlu0 %1080
    %v1082 = vsel %vm62, %v960, 0.0
    %1083 = vadd.xlane.f32.xlu0 %v1082
    %v1084 = vpop.xlane.xlu0 %1083
    %v1085 = vsel %vm62, %v962, 0.0
    %1086 = vadd.xlane.f32.xlu0 %v1085
    %v1087 = vpop.xlane.xlu0 %1086
    %v1088 = vsel %vm62, %v964, 0.0
    %1089 = vadd.xlane.f32.xlu0 %v1088
    %v1090 = vpop.xlane.xlu0 %1089
    %v1091 = vsel %vm62, %v966, 0.0
    %1092 = vadd.xlane.f32.xlu0 %v1091
    %v1093 = vpop.xlane.xlu0 %1092
    %v1094 = vsel %vm62, %v968, 0.0
    %1095 = vadd.xlane.f32.xlu0 %v1094
    %v1096 = vpop.xlane.xlu0 %1095
    %v1097 = vmul.f32 %v1003, %v480
    %v1098 = vmul.f32 %v1006, %v480
    %v1099 = vmul.f32 %v1009, %v480
    %v1100 = vmul.f32 %v1012, %v480
    %v1101 = vmul.f32 %v1015, %v480
    %v1102 = vmul.f32 %v1018, %v480
    %v1103 = vmul.f32 %v1021, %v480
    %v1104 = vmul.f32 %v1024, %v480
    %v1105 = vmul.f32 %v1027, %v480
    %v1106 = vmul.f32 %v1030, %v480
    %v1107 = vmul.f32 %v1033, %v480
    %v1108 = vmul.f32 %v1036, %v480
    %v1109 = vmul.f32 %v1039, %v480
    %v1110 = vmul.f32 %v1042, %v480
    %v1111 = vmul.f32 %v1045, %v480
    %v1112 = vmul.f32 %v1048, %v480
    %v1113 = vmul.f32 %v1051, %v480
    %v1114 = vmul.f32 %v1054, %v480
    %v1115 = vmul.f32 %v1057, %v480
    %v1116 = vmul.f32 %v1060, %v480
    %v1117 = vmul.f32 %v1063, %v480
    %v1118 = vmul.f32 %v1066, %v480
    %v1119 = vmul.f32 %v1069, %v480
    %v1120 = vmul.f32 %v1072, %v480
    %v1121 = vmul.f32 %v1075, %v480
    %v1122 = vmul.f32 %v1078, %v480
    %v1123 = vmul.f32 %v1081, %v480
    %v1124 = vmul.f32 %v1084, %v480
    %v1125 = vmul.f32 %v1087, %v480
    %v1126 = vmul.f32 %v1090, %v480
    %v1127 = vmul.f32 %v1093, %v480
    %v1128 = vmul.f32 %v1096, %v480
    %v1129 = vsub.f32 %v226, %v1097
    %v1130 = vsub.f32 %v231, %v1098
    %v1131 = vsub.f32 %v236, %v1099
    %v1132 = vsub.f32 %v241, %v1100
    %v1133 = vsub.f32 %v246, %v1101
    %v1134 = vsub.f32 %v251, %v1102
    %v1135 = vsub.f32 %v256, %v1103
    %v1136 = vsub.f32 %v261, %v1104
    %v1137 = vsub.f32 %v266, %v1105
    %v1138 = vsub.f32 %v271, %v1106
    %v1139 = vsub.f32 %v276, %v1107
    %v1140 = vsub.f32 %v281, %v1108
    %v1141 = vsub.f32 %v286, %v1109
    %v1142 = vsub.f32 %v291, %v1110
    %v1143 = vsub.f32 %v296, %v1111
    %v1144 = vsub.f32 %v301, %v1112
    %v1145 = vsub.f32 %v306, %v1113
    %v1146 = vsub.f32 %v311, %v1114
    %v1147 = vsub.f32 %v316, %v1115
    %v1148 = vsub.f32 %v321, %v1116
    %v1149 = vsub.f32 %v326, %v1117
    %v1150 = vsub.f32 %v331, %v1118
    %v1151 = vsub.f32 %v336, %v1119
    %v1152 = vsub.f32 %v341, %v1120
    %v1153 = vsub.f32 %v346, %v1121
    %v1154 = vsub.f32 %v351, %v1122
    %v1155 = vsub.f32 %v356, %v1123
    %v1156 = vsub.f32 %v361, %v1124
    %v1157 = vsub.f32 %v366, %v1125
    %v1158 = vsub.f32 %v371, %v1126
    %v1159 = vsub.f32 %v376, %v1127
    %v1160 = vsub.f32 %v381, %v1128
    %v1161 = vmul.f32 %v1129, %v1129
    %v1162 = vmul.f32 %v1130, %v1130
    %v1163 = vmul.f32 %v1131, %v1131
    %v1164 = vmul.f32 %v1132, %v1132
    %v1165 = vmul.f32 %v1133, %v1133
    %v1166 = vmul.f32 %v1134, %v1134
    %v1167 = vmul.f32 %v1135, %v1135
    %v1168 = vmul.f32 %v1136, %v1136
    %v1169 = vmul.f32 %v1137, %v1137
    %v1170 = vmul.f32 %v1138, %v1138
    %v1171 = vmul.f32 %v1139, %v1139
    %v1172 = vmul.f32 %v1140, %v1140
    %v1173 = vmul.f32 %v1141, %v1141
    %v1174 = vmul.f32 %v1142, %v1142
    %v1175 = vmul.f32 %v1143, %v1143
    %v1176 = vmul.f32 %v1144, %v1144
    %v1177 = vmul.f32 %v1145, %v1145
    %v1178 = vmul.f32 %v1146, %v1146
    %v1179 = vmul.f32 %v1147, %v1147
    %v1180 = vmul.f32 %v1148, %v1148
    %v1181 = vmul.f32 %v1149, %v1149
    %v1182 = vmul.f32 %v1150, %v1150
    %v1183 = vmul.f32 %v1151, %v1151
    %v1184 = vmul.f32 %v1152, %v1152
    %v1185 = vmul.f32 %v1153, %v1153
    %v1186 = vmul.f32 %v1154, %v1154
    %v1187 = vmul.f32 %v1155, %v1155
    %v1188 = vmul.f32 %v1156, %v1156
    %v1189 = vmul.f32 %v1157, %v1157
    %v1190 = vmul.f32 %v1158, %v1158
    %v1191 = vmul.f32 %v1159, %v1159
    %v1192 = vmul.f32 %v1160, %v1160
    %1225 = vrot.lane.b32.xlu0 %v1161, 96
    %v1226 = vpop.permute.xlu0 %1225
    %1227 = vrot.lane.b32.xlu0 %v1162, 96
    %v1228 = vpop.permute.xlu0 %1227
    %1229 = vrot.lane.b32.xlu0 %v1163, 96
    %v1230 = vpop.permute.xlu0 %1229
    %1231 = vrot.lane.b32.xlu0 %v1164, 96
    %v1232 = vpop.permute.xlu0 %1231
    %1233 = vrot.lane.b32.xlu0 %v1165, 96
    %v1234 = vpop.permute.xlu0 %1233
    %1235 = vrot.lane.b32.xlu0 %v1166, 96
    %v1236 = vpop.permute.xlu0 %1235
    %1237 = vrot.lane.b32.xlu0 %v1167, 96
    %v1238 = vpop.permute.xlu0 %1237
    %1239 = vrot.lane.b32.xlu0 %v1168, 96
    %v1240 = vpop.permute.xlu0 %1239
    %1241 = vrot.lane.b32.xlu0 %v1169, 96
    %v1242 = vpop.permute.xlu0 %1241
    %1243 = vrot.lane.b32.xlu0 %v1170, 96
    %v1244 = vpop.permute.xlu0 %1243
    %1245 = vrot.lane.b32.xlu0 %v1171, 96
    %v1246 = vpop.permute.xlu0 %1245
    %1247 = vrot.lane.b32.xlu0 %v1172, 96
    %v1248 = vpop.permute.xlu0 %1247
    %1249 = vrot.lane.b32.xlu0 %v1173, 96
    %v1250 = vpop.permute.xlu0 %1249
    %1251 = vrot.lane.b32.xlu0 %v1174, 96
    %v1252 = vpop.permute.xlu0 %1251
    %1253 = vrot.lane.b32.xlu0 %v1175, 96
    %v1254 = vpop.permute.xlu0 %1253
    %1255 = vrot.lane.b32.xlu0 %v1176, 96
    %v1256 = vpop.permute.xlu0 %1255
    %1257 = vrot.lane.b32.xlu0 %v1177, 96
    %v1258 = vpop.permute.xlu0 %1257
    %1259 = vrot.lane.b32.xlu0 %v1178, 96
    %v1260 = vpop.permute.xlu0 %1259
    %1261 = vrot.lane.b32.xlu0 %v1179, 96
    %v1262 = vpop.permute.xlu0 %1261
    %1263 = vrot.lane.b32.xlu0 %v1180, 96
    %v1264 = vpop.permute.xlu0 %1263
    %1265 = vrot.lane.b32.xlu0 %v1181, 96
    %v1266 = vpop.permute.xlu0 %1265
    %1267 = vrot.lane.b32.xlu0 %v1182, 96
    %v1268 = vpop.permute.xlu0 %1267
    %1269 = vrot.lane.b32.xlu0 %v1183, 96
    %v1270 = vpop.permute.xlu0 %1269
    %1271 = vrot.lane.b32.xlu0 %v1184, 96
    %v1272 = vpop.permute.xlu0 %1271
    %1273 = vrot.lane.b32.xlu0 %v1185, 96
    %v1274 = vpop.permute.xlu0 %1273
    %1275 = vrot.lane.b32.xlu0 %v1186, 96
    %v1276 = vpop.permute.xlu0 %1275
    %1277 = vrot.lane.b32.xlu0 %v1187, 96
    %v1278 = vpop.permute.xlu0 %1277
    %1279 = vrot.lane.b32.xlu0 %v1188, 96
    %v1280 = vpop.permute.xlu0 %1279
    %1281 = vrot.lane.b32.xlu0 %v1189, 96
    %v1282 = vpop.permute.xlu0 %1281
    %1283 = vrot.lane.b32.xlu0 %v1190, 96
    %v1284 = vpop.permute.xlu0 %1283
    %1285 = vrot.lane.b32.xlu0 %v1191, 96
    %v1286 = vpop.permute.xlu0 %1285
    %1287 = vrot.lane.b32.xlu0 %v1192, 96
    %v1288 = vpop.permute.xlu0 %1287
    %v1321 = vsel %vm62, %v1226, 0.0
    %1322 = vadd.xlane.f32.xlu0 %v1321
    %v1323 = vpop.xlane.xlu0 %1322
    %v1324 = vsel %vm62, %v1228, 0.0
    %1325 = vadd.xlane.f32.xlu0 %v1324
    %v1326 = vpop.xlane.xlu0 %1325
    %v1327 = vsel %vm62, %v1230, 0.0
    %1328 = vadd.xlane.f32.xlu0 %v1327
    %v1329 = vpop.xlane.xlu0 %1328
    %v1330 = vsel %vm62, %v1232, 0.0
    %1331 = vadd.xlane.f32.xlu0 %v1330
    %v1332 = vpop.xlane.xlu0 %1331
    %v1333 = vsel %vm62, %v1234, 0.0
    %1334 = vadd.xlane.f32.xlu0 %v1333
    %v1335 = vpop.xlane.xlu0 %1334
    %v1336 = vsel %vm62, %v1236, 0.0
    %1337 = vadd.xlane.f32.xlu0 %v1336
    %v1338 = vpop.xlane.xlu0 %1337
    %v1339 = vsel %vm62, %v1238, 0.0
    %1340 = vadd.xlane.f32.xlu0 %v1339
    %v1341 = vpop.xlane.xlu0 %1340
    %v1342 = vsel %vm62, %v1240, 0.0
    %1343 = vadd.xlane.f32.xlu0 %v1342
    %v1344 = vpop.xlane.xlu0 %1343
    %v1345 = vsel %vm62, %v1242, 0.0
    %1346 = vadd.xlane.f32.xlu0 %v1345
    %v1347 = vpop.xlane.xlu0 %1346
    %v1348 = vsel %vm62, %v1244, 0.0
    %1349 = vadd.xlane.f32.xlu0 %v1348
    %v1350 = vpop.xlane.xlu0 %1349
    %v1351 = vsel %vm62, %v1246, 0.0
    %1352 = vadd.xlane.f32.xlu0 %v1351
    %v1353 = vpop.xlane.xlu0 %1352
    %v1354 = vsel %vm62, %v1248, 0.0
    %1355 = vadd.xlane.f32.xlu0 %v1354
    %v1356 = vpop.xlane.xlu0 %1355
    %v1357 = vsel %vm62, %v1250, 0.0
    %1358 = vadd.xlane.f32.xlu0 %v1357
    %v1359 = vpop.xlane.xlu0 %1358
    %v1360 = vsel %vm62, %v1252, 0.0
    %1361 = vadd.xlane.f32.xlu0 %v1360
    %v1362 = vpop.xlane.xlu0 %1361
    %v1363 = vsel %vm62, %v1254, 0.0
    %1364 = vadd.xlane.f32.xlu0 %v1363
    %v1365 = vpop.xlane.xlu0 %1364
    %v1366 = vsel %vm62, %v1256, 0.0
    %1367 = vadd.xlane.f32.xlu0 %v1366
    %v1368 = vpop.xlane.xlu0 %1367
    %v1369 = vsel %vm62, %v1258, 0.0
    %1370 = vadd.xlane.f32.xlu0 %v1369
    %v1371 = vpop.xlane.xlu0 %1370
    %v1372 = vsel %vm62, %v1260, 0.0
    %1373 = vadd.xlane.f32.xlu0 %v1372
    %v1374 = vpop.xlane.xlu0 %1373
    %v1375 = vsel %vm62, %v1262, 0.0
    %1376 = vadd.xlane.f32.xlu0 %v1375
    %v1377 = vpop.xlane.xlu0 %1376
    %v1378 = vsel %vm62, %v1264, 0.0
    %1379 = vadd.xlane.f32.xlu0 %v1378
    %v1380 = vpop.xlane.xlu0 %1379
    %v1381 = vsel %vm62, %v1266, 0.0
    %1382 = vadd.xlane.f32.xlu0 %v1381
    %v1383 = vpop.xlane.xlu0 %1382
    %v1384 = vsel %vm62, %v1268, 0.0
    %1385 = vadd.xlane.f32.xlu0 %v1384
    %v1386 = vpop.xlane.xlu0 %1385
    %v1387 = vsel %vm62, %v1270, 0.0
    %1388 = vadd.xlane.f32.xlu0 %v1387
    %v1389 = vpop.xlane.xlu0 %1388
    %v1390 = vsel %vm62, %v1272, 0.0
    %1391 = vadd.xlane.f32.xlu0 %v1390
    %v1392 = vpop.xlane.xlu0 %1391
    %v1393 = vsel %vm62, %v1274, 0.0
    %1394 = vadd.xlane.f32.xlu0 %v1393
    %v1395 = vpop.xlane.xlu0 %1394
    %v1396 = vsel %vm62, %v1276, 0.0
    %1397 = vadd.xlane.f32.xlu0 %v1396
    %v1398 = vpop.xlane.xlu0 %1397
    %v1399 = vsel %vm62, %v1278, 0.0
    %1400 = vadd.xlane.f32.xlu0 %v1399
    %v1401 = vpop.xlane.xlu0 %1400
    %v1402 = vsel %vm62, %v1280, 0.0
    %1403 = vadd.xlane.f32.xlu0 %v1402
    %v1404 = vpop.xlane.xlu0 %1403
    %v1405 = vsel %vm62, %v1282, 0.0
    %1406 = vadd.xlane.f32.xlu0 %v1405
    %v1407 = vpop.xlane.xlu0 %1406
    %v1408 = vsel %vm62, %v1284, 0.0
    %1409 = vadd.xlane.f32.xlu0 %v1408
    %v1410 = vpop.xlane.xlu0 %1409
    %v1411 = vsel %vm62, %v1286, 0.0
    %1412 = vadd.xlane.f32.xlu0 %v1411
    %v1413 = vpop.xlane.xlu0 %1412
    %v1414 = vsel %vm62, %v1288, 0.0
    %1415 = vadd.xlane.f32.xlu0 %v1414
    %v1416 = vpop.xlane.xlu0 %1415
    %v1417 = vmul.f32 %v1323, %v480
    %v1418 = vmul.f32 %v1326, %v480
    %v1419 = vmul.f32 %v1329, %v480
    %v1420 = vmul.f32 %v1332, %v480
    %v1421 = vmul.f32 %v1335, %v480
    %v1422 = vmul.f32 %v1338, %v480
    %v1423 = vmul.f32 %v1341, %v480
    %v1424 = vmul.f32 %v1344, %v480
    %v1425 = vmul.f32 %v1347, %v480
    %v1426 = vmul.f32 %v1350, %v480
    %v1427 = vmul.f32 %v1353, %v480
    %v1428 = vmul.f32 %v1356, %v480
    %v1429 = vmul.f32 %v1359, %v480
    %v1430 = vmul.f32 %v1362, %v480
    %v1431 = vmul.f32 %v1365, %v480
    %v1432 = vmul.f32 %v1368, %v480
    %v1433 = vmul.f32 %v1371, %v480
    %v1434 = vmul.f32 %v1374, %v480
    %v1435 = vmul.f32 %v1377, %v480
    %v1436 = vmul.f32 %v1380, %v480
    %v1437 = vmul.f32 %v1383, %v480
    %v1438 = vmul.f32 %v1386, %v480
    %v1439 = vmul.f32 %v1389, %v480
    %v1440 = vmul.f32 %v1392, %v480
    %v1441 = vmul.f32 %v1395, %v480
    %v1442 = vmul.f32 %v1398, %v480
    %v1443 = vmul.f32 %v1401, %v480
    %v1444 = vmul.f32 %v1404, %v480
    %v1445 = vmul.f32 %v1407, %v480
    %v1446 = vmul.f32 %v1410, %v480
    %v1447 = vmul.f32 %v1413, %v480
    %v1448 = vmul.f32 %v1416, %v480
    %v1449 = vadd.f32 %v1417, 1e-05
    %v1450 = vadd.f32 %v1418, 1e-05
    %v1451 = vadd.f32 %v1419, 1e-05
    %v1452 = vadd.f32 %v1420, 1e-05
    %v1453 = vadd.f32 %v1421, 1e-05
    %v1454 = vadd.f32 %v1422, 1e-05
    %v1455 = vadd.f32 %v1423, 1e-05
    %v1456 = vadd.f32 %v1424, 1e-05
    %v1457 = vadd.f32 %v1425, 1e-05
    %v1458 = vadd.f32 %v1426, 1e-05
    %v1459 = vadd.f32 %v1427, 1e-05
    %v1460 = vadd.f32 %v1428, 1e-05
    %v1461 = vadd.f32 %v1429, 1e-05
    %v1462 = vadd.f32 %v1430, 1e-05
    %v1463 = vadd.f32 %v1431, 1e-05
    %v1464 = vadd.f32 %v1432, 1e-05
    %v1465 = vadd.f32 %v1433, 1e-05
    %v1466 = vadd.f32 %v1434, 1e-05
    %v1467 = vadd.f32 %v1435, 1e-05
    %v1468 = vadd.f32 %v1436, 1e-05
    %v1469 = vadd.f32 %v1437, 1e-05
    %v1470 = vadd.f32 %v1438, 1e-05
    %v1471 = vadd.f32 %v1439, 1e-05
    %v1472 = vadd.f32 %v1440, 1e-05
    %v1473 = vadd.f32 %v1441, 1e-05
    %v1474 = vadd.f32 %v1442, 1e-05
    %v1475 = vadd.f32 %v1443, 1e-05
    %v1476 = vadd.f32 %v1444, 1e-05
    %v1477 = vadd.f32 %v1445, 1e-05
    %v1478 = vadd.f32 %v1446, 1e-05
    %v1479 = vadd.f32 %v1447, 1e-05
    %v1480 = vadd.f32 %v1448, 1e-05
    %v1481 = vrsqrt.pop %v1449
    %v1482 = vrsqrt.pop %v1450
    %v1483 = vrsqrt.pop %v1451
    %v1484 = vrsqrt.pop %v1452
    %v1485 = vrsqrt.pop %v1453
    %v1486 = vrsqrt.pop %v1454
    %v1487 = vrsqrt.pop %v1455
    %v1488 = vrsqrt.pop %v1456
    %v1489 = vrsqrt.pop %v1457
    %v1490 = vrsqrt.pop %v1458
    %v1491 = vrsqrt.pop %v1459
    %v1492 = vrsqrt.pop %v1460
    %v1493 = vrsqrt.pop %v1461
    %v1494 = vrsqrt.pop %v1462
    %v1495 = vrsqrt.pop %v1463
    %v1496 = vrsqrt.pop %v1464
    %v1497 = vrsqrt.pop %v1465
    %v1498 = vrsqrt.pop %v1466
    %v1499 = vrsqrt.pop %v1467
    %v1500 = vrsqrt.pop %v1468
    %v1501 = vrsqrt.pop %v1469
    %v1502 = vrsqrt.pop %v1470
    %v1503 = vrsqrt.pop %v1471
    %v1504 = vrsqrt.pop %v1472
    %v1505 = vrsqrt.pop %v1473
    %v1506 = vrsqrt.pop %v1474
    %v1507 = vrsqrt.pop %v1475
    %v1508 = vrsqrt.pop %v1476
    %v1509 = vrsqrt.pop %v1477
    %v1510 = vrsqrt.pop %v1478
    %v1511 = vrsqrt.pop %v1479
    %v1512 = vrsqrt.pop %v1480
    %v1513 = vmul.f32 %v1129, %v1481
    %v1514 = vmul.f32 %v1130, %v1482
    %v1515 = vmul.f32 %v1131, %v1483
    %v1516 = vmul.f32 %v1132, %v1484
    %v1517 = vmul.f32 %v1133, %v1485
    %v1518 = vmul.f32 %v1134, %v1486
    %v1519 = vmul.f32 %v1135, %v1487
    %v1520 = vmul.f32 %v1136, %v1488
    %v1521 = vmul.f32 %v1137, %v1489
    %v1522 = vmul.f32 %v1138, %v1490
    %v1523 = vmul.f32 %v1139, %v1491
    %v1524 = vmul.f32 %v1140, %v1492
    %v1525 = vmul.f32 %v1141, %v1493
    %v1526 = vmul.f32 %v1142, %v1494
    %v1527 = vmul.f32 %v1143, %v1495
    %v1528 = vmul.f32 %v1144, %v1496
    %v1529 = vmul.f32 %v1145, %v1497
    %v1530 = vmul.f32 %v1146, %v1498
    %v1531 = vmul.f32 %v1147, %v1499
    %v1532 = vmul.f32 %v1148, %v1500
    %v1533 = vmul.f32 %v1149, %v1501
    %v1534 = vmul.f32 %v1150, %v1502
    %v1535 = vmul.f32 %v1151, %v1503
    %v1536 = vmul.f32 %v1152, %v1504
    %v1537 = vmul.f32 %v1153, %v1505
    %v1538 = vmul.f32 %v1154, %v1506
    %v1539 = vmul.f32 %v1155, %v1507
    %v1540 = vmul.f32 %v1156, %v1508
    %v1541 = vmul.f32 %v1157, %v1509
    %v1542 = vmul.f32 %v1158, %v1510
    %v1543 = vmul.f32 %v1159, %v1511
    %v1544 = vmul.f32 %v1160, %v1512
    %v1545 = vmul.f32 %v1513, %v804
    %v1546 = vmul.f32 %v1514, %v804
    %v1547 = vmul.f32 %v1515, %v804
    %v1548 = vmul.f32 %v1516, %v804
    %v1549 = vmul.f32 %v1517, %v804
    %v1550 = vmul.f32 %v1518, %v804
    %v1551 = vmul.f32 %v1519, %v804
    %v1552 = vmul.f32 %v1520, %v804
    %v1553 = vmul.f32 %v1521, %v804
    %v1554 = vmul.f32 %v1522, %v804
    %v1555 = vmul.f32 %v1523, %v804
    %v1556 = vmul.f32 %v1524, %v804
    %v1557 = vmul.f32 %v1525, %v804
    %v1558 = vmul.f32 %v1526, %v804
    %v1559 = vmul.f32 %v1527, %v804
    %v1560 = vmul.f32 %v1528, %v804
    %v1561 = vmul.f32 %v1529, %v804
    %v1562 = vmul.f32 %v1530, %v804
    %v1563 = vmul.f32 %v1531, %v804
    %v1564 = vmul.f32 %v1532, %v804
    %v1565 = vmul.f32 %v1533, %v804
    %v1566 = vmul.f32 %v1534, %v804
    %v1567 = vmul.f32 %v1535, %v804
    %v1568 = vmul.f32 %v1536, %v804
    %v1569 = vmul.f32 %v1537, %v804
    %v1570 = vmul.f32 %v1538, %v804
    %v1571 = vmul.f32 %v1539, %v804
    %v1572 = vmul.f32 %v1540, %v804
    %v1573 = vmul.f32 %v1541, %v804
    %v1574 = vmul.f32 %v1542, %v804
    %v1575 = vmul.f32 %v1543, %v804
    %v1576 = vmul.f32 %v1544, %v804
    %v1577 = vadd.f32 %v1545, %v840
    %v1578 = vadd.f32 %v1546, %v840
    %v1579 = vadd.f32 %v1547, %v840
    %v1580 = vadd.f32 %v1548, %v840
    %v1581 = vadd.f32 %v1549, %v840
    %v1582 = vadd.f32 %v1550, %v840
    %v1583 = vadd.f32 %v1551, %v840
    %v1584 = vadd.f32 %v1552, %v840
    %v1585 = vadd.f32 %v1553, %v840
    %v1586 = vadd.f32 %v1554, %v840
    %v1587 = vadd.f32 %v1555, %v840
    %v1588 = vadd.f32 %v1556, %v840
    %v1589 = vadd.f32 %v1557, %v840
    %v1590 = vadd.f32 %v1558, %v840
    %v1591 = vadd.f32 %v1559, %v840
    %v1592 = vadd.f32 %v1560, %v840
    %v1593 = vadd.f32 %v1561, %v840
    %v1594 = vadd.f32 %v1562, %v840
    %v1595 = vadd.f32 %v1563, %v840
    %v1596 = vadd.f32 %v1564, %v840
    %v1597 = vadd.f32 %v1565, %v840
    %v1598 = vadd.f32 %v1566, %v840
    %v1599 = vadd.f32 %v1567, %v840
    %v1600 = vadd.f32 %v1568, %v840
    %v1601 = vadd.f32 %v1569, %v840
    %v1602 = vadd.f32 %v1570, %v840
    %v1603 = vadd.f32 %v1571, %v840
    %v1604 = vadd.f32 %v1572, %v840
    %v1605 = vadd.f32 %v1573, %v840
    %v1606 = vadd.f32 %v1574, %v840
    %v1607 = vadd.f32 %v1575, %v840
    %v1608 = vadd.f32 %v1576, %v840
    %v1609 = vmax.f32 %v841, 0.0
    %v1610 = vmax.f32 %v842, 0.0
    %v1611 = vmax.f32 %v843, 0.0
    %v1612 = vmax.f32 %v844, 0.0
    %v1613 = vmax.f32 %v845, 0.0
    %v1614 = vmax.f32 %v846, 0.0
    %v1615 = vmax.f32 %v847, 0.0
    %v1616 = vmax.f32 %v848, 0.0
    %v1617 = vmax.f32 %v849, 0.0
    %v1618 = vmax.f32 %v850, 0.0
    %v1619 = vmax.f32 %v851, 0.0
    %v1620 = vmax.f32 %v852, 0.0
    %v1621 = vmax.f32 %v853, 0.0
    %v1622 = vmax.f32 %v854, 0.0
    %v1623 = vmax.f32 %v855, 0.0
    %v1624 = vmax.f32 %v856, 0.0
    %v1625 = vmax.f32 %v857, 0.0
    %v1626 = vmax.f32 %v858, 0.0
    %v1627 = vmax.f32 %v859, 0.0
    %v1628 = vmax.f32 %v860, 0.0
    %v1629 = vmax.f32 %v861, 0.0
    %v1630 = vmax.f32 %v862, 0.0
    %v1631 = vmax.f32 %v863, 0.0
    %v1632 = vmax.f32 %v864, 0.0
    %v1633 = vmax.f32 %v865, 0.0
    %v1634 = vmax.f32 %v866, 0.0
    %v1635 = vmax.f32 %v867, 0.0
    %v1636 = vmax.f32 %v868, 0.0
    %v1637 = vmax.f32 %v869, 0.0
    %v1638 = vmax.f32 %v870, 0.0
    %v1639 = vmax.f32 %v871, 0.0
    %v1640 = vmax.f32 %v872, 0.0
    %v1641 = vld [vmem:[%s2] sm:$0xff]
    %v1642 = vld [vmem:[%s2 + $0x8] sm:$0xff]
    %v1643 = vld [vmem:[%s2 + $0x10] sm:$0xff]
    %v1644 = vld [vmem:[%s2 + $0x18] sm:$0xff]
    %v1645 = vlaneseq
    %v1646 = vshrl.u32 %v1645, 7
    %v1647 = vsub.s32 3, %v1646
    %v1648 = vrot.slane %v53, %v1647
    %v1650 = vsel %vm62, %v1609, 0
    %v1653 = vsel %vm62, %v1610, 0
    %v1656 = vsel %vm62, %v1611, 0
    %v1659 = vsel %vm62, %v1612, 0
    %v1662 = vsel %vm62, %v1613, 0
    %v1665 = vsel %vm62, %v1614, 0
    %v1668 = vsel %vm62, %v1615, 0
    %v1671 = vsel %vm62, %v1616, 0
    %v1674 = vsel %vm62, %v1617, 0
    %v1677 = vsel %vm62, %v1618, 0
    %v1680 = vsel %vm62, %v1619, 0
    %v1683 = vsel %vm62, %v1620, 0
    %v1686 = vsel %vm62, %v1621, 0
    %v1689 = vsel %vm62, %v1622, 0
    %v1692 = vsel %vm62, %v1623, 0
    %v1695 = vsel %vm62, %v1624, 0
    %v1698 = vsel %vm62, %v1625, 0
    %v1701 = vsel %vm62, %v1626, 0
    %v1704 = vsel %vm62, %v1627, 0
    %v1707 = vsel %vm62, %v1628, 0
    %v1710 = vsel %vm62, %v1629, 0
    %v1713 = vsel %vm62, %v1630, 0
    %v1716 = vsel %vm62, %v1631, 0
    %v1719 = vsel %vm62, %v1632, 0
    %v1722 = vsel %vm62, %v1633, 0
    %v1725 = vsel %vm62, %v1634, 0
    %v1728 = vsel %vm62, %v1635, 0
    %v1731 = vsel %vm62, %v1636, 0
    %v1734 = vsel %vm62, %v1637, 0
    %v1737 = vsel %vm62, %v1638, 0
    %v1740 = vsel %vm62, %v1639, 0
    %v1743 = vsel %vm62, %v1640, 0
    %1745 = vmatprep.subr.mxu0 0.0
    %1746 = vmatpush1.msra.mxu0 0.0
    %1747 = vmatprep.subr.mxu0 0.0
    %1748 = vmatpush1.msra.mxu0 0.0
    %1749 = vmatprep.subr.mxu0 0.0
    %1750 = vmatpush1.msra.mxu0 0.0
    %1751 = vmatprep.subr.mxu0 0.0
    %1752 = vmatpush1.msra.mxu0 0.0
    %1753 = vmatprep.subr.mxu0 0.0
    %1754 = vmatpush1.msra.mxu0 0.0
    %1755 = vmatprep.subr.mxu0 0.0
    %1756 = vmatpush1.msra.mxu0 0.0
    %1757 = vmatprep.subr.mxu0 0.0
    %1758 = vmatpush1.msra.mxu0 0.0
    %1759 = vmatprep.subr.mxu0 0.0
    %1760 = vmatpush1.msra.mxu0 0.0
    %1761 = vmatprep.subr.mxu0 0.0
    %1762 = vmatpush1.msra.mxu0 0.0
    %1763 = vmatprep.subr.mxu0 0.0
    %1764 = vmatpush1.msra.mxu0 0.0
    %1765 = vmatprep.subr.mxu0 0.0
    %1766 = vmatpush1.msra.mxu0 0.0
    %1767 = vmatprep.subr.mxu0 0.0
    %1768 = vmatpush1.msra.mxu0 0.0
    %1769 = vmatprep.subr.mxu0 0.0
    %1770 = vmatpush1.msra.mxu0 %v1644
    %1771 = vmatprep.subr.mxu0 0.0
    %1772 = vmatpush1.msra.mxu0 %v1643
    %1773 = vmatprep.subr.mxu0 0.0
    %1774 = vmatpush1.msra.mxu0 %v1642
    %1775 = vmatprep.subr.mxu0 0.0
    %1776 = vmatpush1.msra.mxu0 %v1641
    %1777 = vmatprep.subr.mxu0 0.0
    %1778 = vmatpush2.msra.mxu0 0.0
    %1779 = vmatprep.subr.mxu0 0.0
    %1780 = vmatpush2.msra.mxu0 0.0
    %1781 = vmatprep.subr.mxu0 0.0
    %1782 = vmatpush2.msra.mxu0 0.0
    %1783 = vmatprep.subr.mxu0 0.0
    %1784 = vmatpush2.msra.mxu0 0.0
    %1785 = vmatprep.subr.mxu0 0.0
    %1786 = vmatpush2.msra.mxu0 0.0
    %1787 = vmatprep.subr.mxu0 0.0
    %1788 = vmatpush2.msra.mxu0 0.0
    %1789 = vmatprep.subr.mxu0 0.0
    %1790 = vmatpush2.msra.mxu0 0.0
    %1791 = vmatprep.subr.mxu0 0.0
    %1792 = vmatpush2.msra.mxu0 0.0
    %1793 = vmatprep.subr.mxu0 0.0
    %1794 = vmatpush2.msra.mxu0 0.0
    %1795 = vmatprep.subr.mxu0 0.0
    %1796 = vmatpush2.msra.mxu0 0.0
    %1797 = vmatprep.subr.mxu0 0.0
    %1798 = vmatpush2.msra.mxu0 0.0
    %1799 = vmatprep.subr.mxu0 0.0
    %1800 = vmatpush2.msra.mxu0 0.0
    %1801 = vmatprep.subr.mxu0 0.0
    %1802 = vmatpush2.msra.mxu0 0.0
    %1803 = vmatprep.subr.mxu0 0.0
    %1804 = vmatpush2.msra.mxu0 0.0
    %1805 = vmatprep.subr.mxu0 0.0
    %1806 = vmatpush2.msra.mxu0 0.0
    %1807 = vmatprep.subr.mxu0 0.0
    %1808 = vmatpush2.msra.mxu0 0.0
    %1809 = vmatprep.mubr.f32.mxu0 0.0
    %1810 = vmatmul.mubr.f32.gmra.mxu0 %v1650
    %v1811 = vpop.f32.mrf.mxu0
    %v1812 = vadd.f32 %v1648, %v1811
    %v1813 = vpop.f32.mrf.mxu0
    %1814 = vmatprep.mubr.f32.mxu0 0.0
    %1815 = vmatmul.mubr.f32.gmra.mxu0 %v1653
    %v1816 = vpop.f32.mrf.mxu0
    %v1817 = vadd.f32 %v1648, %v1816
    %v1818 = vpop.f32.mrf.mxu0
    %1819 = vmatprep.mubr.f32.mxu0 0.0
    %1820 = vmatmul.mubr.f32.gmra.mxu0 %v1656
    %v1821 = vpop.f32.mrf.mxu0
    %v1822 = vadd.f32 %v1648, %v1821
    %v1823 = vpop.f32.mrf.mxu0
    %1824 = vmatprep.mubr.f32.mxu0 0.0
    %1825 = vmatmul.mubr.f32.gmra.mxu0 %v1659
    %v1826 = vpop.f32.mrf.mxu0
    %v1827 = vadd.f32 %v1648, %v1826
    %v1828 = vpop.f32.mrf.mxu0
    %1829 = vmatprep.mubr.f32.mxu0 0.0
    %1830 = vmatmul.mubr.f32.gmra.mxu0 %v1662
    %v1831 = vpop.f32.mrf.mxu0
    %v1832 = vadd.f32 %v1648, %v1831
    %v1833 = vpop.f32.mrf.mxu0
    %1834 = vmatprep.mubr.f32.mxu0 0.0
    %1835 = vmatmul.mubr.f32.gmra.mxu0 %v1665
    %v1836 = vpop.f32.mrf.mxu0
    %v1837 = vadd.f32 %v1648, %v1836
    %v1838 = vpop.f32.mrf.mxu0
    %1839 = vmatprep.mubr.f32.mxu0 0.0
    %1840 = vmatmul.mubr.f32.gmra.mxu0 %v1668
    %v1841 = vpop.f32.mrf.mxu0
    %v1842 = vadd.f32 %v1648, %v1841
    %v1843 = vpop.f32.mrf.mxu0
    %1844 = vmatprep.mubr.f32.mxu0 0.0
    %1845 = vmatmul.mubr.f32.gmra.mxu0 %v1671
    %v1846 = vpop.f32.mrf.mxu0
    %v1847 = vadd.f32 %v1648, %v1846
    %v1848 = vpop.f32.mrf.mxu0
    %1849 = vmatprep.mubr.f32.mxu0 0.0
    %1850 = vmatmul.mubr.f32.gmra.mxu0 %v1674
    %v1851 = vpop.f32.mrf.mxu0
    %v1852 = vadd.f32 %v1648, %v1851
    %v1853 = vpop.f32.mrf.mxu0
    %1854 = vmatprep.mubr.f32.mxu0 0.0
    %1855 = vmatmul.mubr.f32.gmra.mxu0 %v1677
    %v1856 = vpop.f32.mrf.mxu0
    %v1857 = vadd.f32 %v1648, %v1856
    %v1858 = vpop.f32.mrf.mxu0
    %1859 = vmatprep.mubr.f32.mxu0 0.0
    %1860 = vmatmul.mubr.f32.gmra.mxu0 %v1680
    %v1861 = vpop.f32.mrf.mxu0
    %v1862 = vadd.f32 %v1648, %v1861
    %v1863 = vpop.f32.mrf.mxu0
    %1864 = vmatprep.mubr.f32.mxu0 0.0
    %1865 = vmatmul.mubr.f32.gmra.mxu0 %v1683
    %v1866 = vpop.f32.mrf.mxu0
    %v1867 = vadd.f32 %v1648, %v1866
    %v1868 = vpop.f32.mrf.mxu0
    %1869 = vmatprep.mubr.f32.mxu0 0.0
    %1870 = vmatmul.mubr.f32.gmra.mxu0 %v1686
    %v1871 = vpop.f32.mrf.mxu0
    %v1872 = vadd.f32 %v1648, %v1871
    %v1873 = vpop.f32.mrf.mxu0
    %1874 = vmatprep.mubr.f32.mxu0 0.0
    %1875 = vmatmul.mubr.f32.gmra.mxu0 %v1689
    %v1876 = vpop.f32.mrf.mxu0
    %v1877 = vadd.f32 %v1648, %v1876
    %v1878 = vpop.f32.mrf.mxu0
    %1879 = vmatprep.mubr.f32.mxu0 0.0
    %1880 = vmatmul.mubr.f32.gmra.mxu0 %v1692
    %v1881 = vpop.f32.mrf.mxu0
    %v1882 = vadd.f32 %v1648, %v1881
    %v1883 = vpop.f32.mrf.mxu0
    %1884 = vmatprep.mubr.f32.mxu0 0.0
    %1885 = vmatmul.mubr.f32.gmra.mxu0 %v1695
    %v1886 = vpop.f32.mrf.mxu0
    %v1887 = vadd.f32 %v1648, %v1886
    %v1888 = vpop.f32.mrf.mxu0
    %1889 = vmatprep.mubr.f32.mxu0 0.0
    %1890 = vmatmul.mubr.f32.gmra.mxu0 %v1698
    %v1891 = vpop.f32.mrf.mxu0
    %v1892 = vadd.f32 %v1648, %v1891
    %v1893 = vpop.f32.mrf.mxu0
    %1894 = vmatprep.mubr.f32.mxu0 0.0
    %1895 = vmatmul.mubr.f32.gmra.mxu0 %v1701
    %v1896 = vpop.f32.mrf.mxu0
    %v1897 = vadd.f32 %v1648, %v1896
    %v1898 = vpop.f32.mrf.mxu0
    %1899 = vmatprep.mubr.f32.mxu0 0.0
    %1900 = vmatmul.mubr.f32.gmra.mxu0 %v1704
    %v1901 = vpop.f32.mrf.mxu0
    %v1902 = vadd.f32 %v1648, %v1901
    %v1903 = vpop.f32.mrf.mxu0
    %1904 = vmatprep.mubr.f32.mxu0 0.0
    %1905 = vmatmul.mubr.f32.gmra.mxu0 %v1707
    %v1906 = vpop.f32.mrf.mxu0
    %v1907 = vadd.f32 %v1648, %v1906
    %v1908 = vpop.f32.mrf.mxu0
    %1909 = vmatprep.mubr.f32.mxu0 0.0
    %1910 = vmatmul.mubr.f32.gmra.mxu0 %v1710
    %v1911 = vpop.f32.mrf.mxu0
    %v1912 = vadd.f32 %v1648, %v1911
    %v1913 = vpop.f32.mrf.mxu0
    %1914 = vmatprep.mubr.f32.mxu0 0.0
    %1915 = vmatmul.mubr.f32.gmra.mxu0 %v1713
    %v1916 = vpop.f32.mrf.mxu0
    %v1917 = vadd.f32 %v1648, %v1916
    %v1918 = vpop.f32.mrf.mxu0
    %1919 = vmatprep.mubr.f32.mxu0 0.0
    %1920 = vmatmul.mubr.f32.gmra.mxu0 %v1716
    %v1921 = vpop.f32.mrf.mxu0
    %v1922 = vadd.f32 %v1648, %v1921
    %v1923 = vpop.f32.mrf.mxu0
    %1924 = vmatprep.mubr.f32.mxu0 0.0
    %1925 = vmatmul.mubr.f32.gmra.mxu0 %v1719
    %v1926 = vpop.f32.mrf.mxu0
    %v1927 = vadd.f32 %v1648, %v1926
    %v1928 = vpop.f32.mrf.mxu0
    %1929 = vmatprep.mubr.f32.mxu0 0.0
    %1930 = vmatmul.mubr.f32.gmra.mxu0 %v1722
    %v1931 = vpop.f32.mrf.mxu0
    %v1932 = vadd.f32 %v1648, %v1931
    %v1933 = vpop.f32.mrf.mxu0
    %1934 = vmatprep.mubr.f32.mxu0 0.0
    %1935 = vmatmul.mubr.f32.gmra.mxu0 %v1725
    %v1936 = vpop.f32.mrf.mxu0
    %v1937 = vadd.f32 %v1648, %v1936
    %v1938 = vpop.f32.mrf.mxu0
    %1939 = vmatprep.mubr.f32.mxu0 0.0
    %1940 = vmatmul.mubr.f32.gmra.mxu0 %v1728
    %v1941 = vpop.f32.mrf.mxu0
    %v1942 = vadd.f32 %v1648, %v1941
    %v1943 = vpop.f32.mrf.mxu0
    %1944 = vmatprep.mubr.f32.mxu0 0.0
    %1945 = vmatmul.mubr.f32.gmra.mxu0 %v1731
    %v1946 = vpop.f32.mrf.mxu0
    %v1947 = vadd.f32 %v1648, %v1946
    %v1948 = vpop.f32.mrf.mxu0
    %1949 = vmatprep.mubr.f32.mxu0 0.0
    %1950 = vmatmul.mubr.f32.gmra.mxu0 %v1734
    %v1951 = vpop.f32.mrf.mxu0
    %v1952 = vadd.f32 %v1648, %v1951
    %v1953 = vpop.f32.mrf.mxu0
    %1954 = vmatprep.mubr.f32.mxu0 0.0
    %1955 = vmatmul.mubr.f32.gmra.mxu0 %v1737
    %v1956 = vpop.f32.mrf.mxu0
    %v1957 = vadd.f32 %v1648, %v1956
    %v1958 = vpop.f32.mrf.mxu0
    %1959 = vmatprep.mubr.f32.mxu0 0.0
    %1960 = vmatmul.mubr.f32.gmra.mxu0 %v1740
    %v1961 = vpop.f32.mrf.mxu0
    %v1962 = vadd.f32 %v1648, %v1961
    %v1963 = vpop.f32.mrf.mxu0
    %1964 = vmatprep.mubr.f32.mxu0 0.0
    %1965 = vmatmul.mubr.f32.gmra.mxu0 %v1743
    %v1966 = vpop.f32.mrf.mxu0
    %v1967 = vadd.f32 %v1648, %v1966
    %v1968 = vpop.f32.mrf.mxu0
    %1969 = vdwg.mxu0
    %v1970 = vsel %vm62, %v1812, 0.0
    %1971 = vadd.xlane.f32.xlu0 %v1970
    %v1972 = vpop.xlane.xlu0 %1971
    %v1973 = vsel %vm62, %v1817, 0.0
    %1974 = vadd.xlane.f32.xlu0 %v1973
    %v1975 = vpop.xlane.xlu0 %1974
    %v1976 = vsel %vm62, %v1822, 0.0
    %1977 = vadd.xlane.f32.xlu0 %v1976
    %v1978 = vpop.xlane.xlu0 %1977
    %v1979 = vsel %vm62, %v1827, 0.0
    %1980 = vadd.xlane.f32.xlu0 %v1979
    %v1981 = vpop.xlane.xlu0 %1980
    %v1982 = vsel %vm62, %v1832, 0.0
    %1983 = vadd.xlane.f32.xlu0 %v1982
    %v1984 = vpop.xlane.xlu0 %1983
    %v1985 = vsel %vm62, %v1837, 0.0
    %1986 = vadd.xlane.f32.xlu0 %v1985
    %v1987 = vpop.xlane.xlu0 %1986
    %v1988 = vsel %vm62, %v1842, 0.0
    %1989 = vadd.xlane.f32.xlu0 %v1988
    %v1990 = vpop.xlane.xlu0 %1989
    %v1991 = vsel %vm62, %v1847, 0.0
    %1992 = vadd.xlane.f32.xlu0 %v1991
    %v1993 = vpop.xlane.xlu0 %1992
    %v1994 = vsel %vm62, %v1852, 0.0
    %1995 = vadd.xlane.f32.xlu0 %v1994
    %v1996 = vpop.xlane.xlu0 %1995
    %v1997 = vsel %vm62, %v1857, 0.0
    %1998 = vadd.xlane.f32.xlu0 %v1997
    %v1999 = vpop.xlane.xlu0 %1998
    %v2000 = vsel %vm62, %v1862, 0.0
    %2001 = vadd.xlane.f32.xlu0 %v2000
    %v2002 = vpop.xlane.xlu0 %2001
    %v2003 = vsel %vm62, %v1867, 0.0
    %2004 = vadd.xlane.f32.xlu0 %v2003
    %v2005 = vpop.xlane.xlu0 %2004
    %v2006 = vsel %vm62, %v1872, 0.0
    %2007 = vadd.xlane.f32.xlu0 %v2006
    %v2008 = vpop.xlane.xlu0 %2007
    %v2009 = vsel %vm62, %v1877, 0.0
    %2010 = vadd.xlane.f32.xlu0 %v2009
    %v2011 = vpop.xlane.xlu0 %2010
    %v2012 = vsel %vm62, %v1882, 0.0
    %2013 = vadd.xlane.f32.xlu0 %v2012
    %v2014 = vpop.xlane.xlu0 %2013
    %v2015 = vsel %vm62, %v1887, 0.0
    %2016 = vadd.xlane.f32.xlu0 %v2015
    %v2017 = vpop.xlane.xlu0 %2016
    %v2018 = vsel %vm62, %v1892, 0.0
    %2019 = vadd.xlane.f32.xlu0 %v2018
    %v2020 = vpop.xlane.xlu0 %2019
    %v2021 = vsel %vm62, %v1897, 0.0
    %2022 = vadd.xlane.f32.xlu0 %v2021
    %v2023 = vpop.xlane.xlu0 %2022
    %v2024 = vsel %vm62, %v1902, 0.0
    %2025 = vadd.xlane.f32.xlu0 %v2024
    %v2026 = vpop.xlane.xlu0 %2025
    %v2027 = vsel %vm62, %v1907, 0.0
    %2028 = vadd.xlane.f32.xlu0 %v2027
    %v2029 = vpop.xlane.xlu0 %2028
    %v2030 = vsel %vm62, %v1912, 0.0
    %2031 = vadd.xlane.f32.xlu0 %v2030
    %v2032 = vpop.xlane.xlu0 %2031
    %v2033 = vsel %vm62, %v1917, 0.0
    %2034 = vadd.xlane.f32.xlu0 %v2033
    %v2035 = vpop.xlane.xlu0 %2034
    %v2036 = vsel %vm62, %v1922, 0.0
    %2037 = vadd.xlane.f32.xlu0 %v2036
    %v2038 = vpop.xlane.xlu0 %2037
    %v2039 = vsel %vm62, %v1927, 0.0
    %2040 = vadd.xlane.f32.xlu0 %v2039
    %v2041 = vpop.xlane.xlu0 %2040
    %v2042 = vsel %vm62, %v1932, 0.0
    %2043 = vadd.xlane.f32.xlu0 %v2042
    %v2044 = vpop.xlane.xlu0 %2043
    %v2045 = vsel %vm62, %v1937, 0.0
    %2046 = vadd.xlane.f32.xlu0 %v2045
    %v2047 = vpop.xlane.xlu0 %2046
    %v2048 = vsel %vm62, %v1942, 0.0
    %2049 = vadd.xlane.f32.xlu0 %v2048
    %v2050 = vpop.xlane.xlu0 %2049
    %v2051 = vsel %vm62, %v1947, 0.0
    %2052 = vadd.xlane.f32.xlu0 %v2051
    %v2053 = vpop.xlane.xlu0 %2052
    %v2054 = vsel %vm62, %v1952, 0.0
    %2055 = vadd.xlane.f32.xlu0 %v2054
    %v2056 = vpop.xlane.xlu0 %2055
    %v2057 = vsel %vm62, %v1957, 0.0
    %2058 = vadd.xlane.f32.xlu0 %v2057
    %v2059 = vpop.xlane.xlu0 %2058
    %v2060 = vsel %vm62, %v1962, 0.0
    %2061 = vadd.xlane.f32.xlu0 %v2060
    %v2062 = vpop.xlane.xlu0 %2061
    %v2063 = vsel %vm62, %v1967, 0.0
    %2064 = vadd.xlane.f32.xlu0 %v2063
    %v2065 = vpop.xlane.xlu0 %2064
    %v2066 = vmul.f32 %v1972, %v480
    %v2067 = vmul.f32 %v1975, %v480
    %v2068 = vmul.f32 %v1978, %v480
    %v2069 = vmul.f32 %v1981, %v480
    %v2070 = vmul.f32 %v1984, %v480
    %v2071 = vmul.f32 %v1987, %v480
    %v2072 = vmul.f32 %v1990, %v480
    %v2073 = vmul.f32 %v1993, %v480
    %v2074 = vmul.f32 %v1996, %v480
    %v2075 = vmul.f32 %v1999, %v480
    %v2076 = vmul.f32 %v2002, %v480
    %v2077 = vmul.f32 %v2005, %v480
    %v2078 = vmul.f32 %v2008, %v480
    %v2079 = vmul.f32 %v2011, %v480
    %v2080 = vmul.f32 %v2014, %v480
    %v2081 = vmul.f32 %v2017, %v480
    %v2082 = vmul.f32 %v2020, %v480
    %v2083 = vmul.f32 %v2023, %v480
    %v2084 = vmul.f32 %v2026, %v480
    %v2085 = vmul.f32 %v2029, %v480
    %v2086 = vmul.f32 %v2032, %v480
    %v2087 = vmul.f32 %v2035, %v480
    %v2088 = vmul.f32 %v2038, %v480
    %v2089 = vmul.f32 %v2041, %v480
    %v2090 = vmul.f32 %v2044, %v480
    %v2091 = vmul.f32 %v2047, %v480
    %v2092 = vmul.f32 %v2050, %v480
    %v2093 = vmul.f32 %v2053, %v480
    %v2094 = vmul.f32 %v2056, %v480
    %v2095 = vmul.f32 %v2059, %v480
    %v2096 = vmul.f32 %v2062, %v480
    %v2097 = vmul.f32 %v2065, %v480
    %v2098 = vsub.f32 %v1812, %v2066
    %v2099 = vsub.f32 %v1817, %v2067
    %v2100 = vsub.f32 %v1822, %v2068
    %v2101 = vsub.f32 %v1827, %v2069
    %v2102 = vsub.f32 %v1832, %v2070
    %v2103 = vsub.f32 %v1837, %v2071
    %v2104 = vsub.f32 %v1842, %v2072
    %v2105 = vsub.f32 %v1847, %v2073
    %v2106 = vsub.f32 %v1852, %v2074
    %v2107 = vsub.f32 %v1857, %v2075
    %v2108 = vsub.f32 %v1862, %v2076
    %v2109 = vsub.f32 %v1867, %v2077
    %v2110 = vsub.f32 %v1872, %v2078
    %v2111 = vsub.f32 %v1877, %v2079
    %v2112 = vsub.f32 %v1882, %v2080
    %v2113 = vsub.f32 %v1887, %v2081
    %v2114 = vsub.f32 %v1892, %v2082
    %v2115 = vsub.f32 %v1897, %v2083
    %v2116 = vsub.f32 %v1902, %v2084
    %v2117 = vsub.f32 %v1907, %v2085
    %v2118 = vsub.f32 %v1912, %v2086
    %v2119 = vsub.f32 %v1917, %v2087
    %v2120 = vsub.f32 %v1922, %v2088
    %v2121 = vsub.f32 %v1927, %v2089
    %v2122 = vsub.f32 %v1932, %v2090
    %v2123 = vsub.f32 %v1937, %v2091
    %v2124 = vsub.f32 %v1942, %v2092
    %v2125 = vsub.f32 %v1947, %v2093
    %v2126 = vsub.f32 %v1952, %v2094
    %v2127 = vsub.f32 %v1957, %v2095
    %v2128 = vsub.f32 %v1962, %v2096
    %v2129 = vsub.f32 %v1967, %v2097
    %v2130 = vmul.f32 %v2098, %v2098
    %v2131 = vmul.f32 %v2099, %v2099
    %v2132 = vmul.f32 %v2100, %v2100
    %v2133 = vmul.f32 %v2101, %v2101
    %v2134 = vmul.f32 %v2102, %v2102
    %v2135 = vmul.f32 %v2103, %v2103
    %v2136 = vmul.f32 %v2104, %v2104
    %v2137 = vmul.f32 %v2105, %v2105
    %v2138 = vmul.f32 %v2106, %v2106
    %v2139 = vmul.f32 %v2107, %v2107
    %v2140 = vmul.f32 %v2108, %v2108
    %v2141 = vmul.f32 %v2109, %v2109
    %v2142 = vmul.f32 %v2110, %v2110
    %v2143 = vmul.f32 %v2111, %v2111
    %v2144 = vmul.f32 %v2112, %v2112
    %v2145 = vmul.f32 %v2113, %v2113
    %v2146 = vmul.f32 %v2114, %v2114
    %v2147 = vmul.f32 %v2115, %v2115
    %v2148 = vmul.f32 %v2116, %v2116
    %v2149 = vmul.f32 %v2117, %v2117
    %v2150 = vmul.f32 %v2118, %v2118
    %v2151 = vmul.f32 %v2119, %v2119
    %v2152 = vmul.f32 %v2120, %v2120
    %v2153 = vmul.f32 %v2121, %v2121
    %v2154 = vmul.f32 %v2122, %v2122
    %v2155 = vmul.f32 %v2123, %v2123
    %v2156 = vmul.f32 %v2124, %v2124
    %v2157 = vmul.f32 %v2125, %v2125
    %v2158 = vmul.f32 %v2126, %v2126
    %v2159 = vmul.f32 %v2127, %v2127
    %v2160 = vmul.f32 %v2128, %v2128
    %v2161 = vmul.f32 %v2129, %v2129
    %v2162 = vsel %vm62, %v2130, 0.0
    %2163 = vadd.xlane.f32.xlu0 %v2162
    %v2164 = vpop.xlane.xlu0 %2163
    %v2165 = vsel %vm62, %v2131, 0.0
    %2166 = vadd.xlane.f32.xlu0 %v2165
    %v2167 = vpop.xlane.xlu0 %2166
    %v2168 = vsel %vm62, %v2132, 0.0
    %2169 = vadd.xlane.f32.xlu0 %v2168
    %v2170 = vpop.xlane.xlu0 %2169
    %v2171 = vsel %vm62, %v2133, 0.0
    %2172 = vadd.xlane.f32.xlu0 %v2171
    %v2173 = vpop.xlane.xlu0 %2172
    %v2174 = vsel %vm62, %v2134, 0.0
    %2175 = vadd.xlane.f32.xlu0 %v2174
    %v2176 = vpop.xlane.xlu0 %2175
    %v2177 = vsel %vm62, %v2135, 0.0
    %2178 = vadd.xlane.f32.xlu0 %v2177
    %v2179 = vpop.xlane.xlu0 %2178
    %v2180 = vsel %vm62, %v2136, 0.0
    %2181 = vadd.xlane.f32.xlu0 %v2180
    %v2182 = vpop.xlane.xlu0 %2181
    %v2183 = vsel %vm62, %v2137, 0.0
    %2184 = vadd.xlane.f32.xlu0 %v2183
    %v2185 = vpop.xlane.xlu0 %2184
    %v2186 = vsel %vm62, %v2138, 0.0
    %2187 = vadd.xlane.f32.xlu0 %v2186
    %v2188 = vpop.xlane.xlu0 %2187
    %v2189 = vsel %vm62, %v2139, 0.0
    %2190 = vadd.xlane.f32.xlu0 %v2189
    %v2191 = vpop.xlane.xlu0 %2190
    %v2192 = vsel %vm62, %v2140, 0.0
    %2193 = vadd.xlane.f32.xlu0 %v2192
    %v2194 = vpop.xlane.xlu0 %2193
    %v2195 = vsel %vm62, %v2141, 0.0
    %2196 = vadd.xlane.f32.xlu0 %v2195
    %v2197 = vpop.xlane.xlu0 %2196
    %v2198 = vsel %vm62, %v2142, 0.0
    %2199 = vadd.xlane.f32.xlu0 %v2198
    %v2200 = vpop.xlane.xlu0 %2199
    %v2201 = vsel %vm62, %v2143, 0.0
    %2202 = vadd.xlane.f32.xlu0 %v2201
    %v2203 = vpop.xlane.xlu0 %2202
    %v2204 = vsel %vm62, %v2144, 0.0
    %2205 = vadd.xlane.f32.xlu0 %v2204
    %v2206 = vpop.xlane.xlu0 %2205
    %v2207 = vsel %vm62, %v2145, 0.0
    %2208 = vadd.xlane.f32.xlu0 %v2207
    %v2209 = vpop.xlane.xlu0 %2208
    %v2210 = vsel %vm62, %v2146, 0.0
    %2211 = vadd.xlane.f32.xlu0 %v2210
    %v2212 = vpop.xlane.xlu0 %2211
    %v2213 = vsel %vm62, %v2147, 0.0
    %2214 = vadd.xlane.f32.xlu0 %v2213
    %v2215 = vpop.xlane.xlu0 %2214
    %v2216 = vsel %vm62, %v2148, 0.0
    %2217 = vadd.xlane.f32.xlu0 %v2216
    %v2218 = vpop.xlane.xlu0 %2217
    %v2219 = vsel %vm62, %v2149, 0.0
    %2220 = vadd.xlane.f32.xlu0 %v2219
    %v2221 = vpop.xlane.xlu0 %2220
    %v2222 = vsel %vm62, %v2150, 0.0
    %2223 = vadd.xlane.f32.xlu0 %v2222
    %v2224 = vpop.xlane.xlu0 %2223
    %v2225 = vsel %vm62, %v2151, 0.0
    %2226 = vadd.xlane.f32.xlu0 %v2225
    %v2227 = vpop.xlane.xlu0 %2226
    %v2228 = vsel %vm62, %v2152, 0.0
    %2229 = vadd.xlane.f32.xlu0 %v2228
    %v2230 = vpop.xlane.xlu0 %2229
    %v2231 = vsel %vm62, %v2153, 0.0
    %2232 = vadd.xlane.f32.xlu0 %v2231
    %v2233 = vpop.xlane.xlu0 %2232
    %v2234 = vsel %vm62, %v2154, 0.0
    %2235 = vadd.xlane.f32.xlu0 %v2234
    %v2236 = vpop.xlane.xlu0 %2235
    %v2237 = vsel %vm62, %v2155, 0.0
    %2238 = vadd.xlane.f32.xlu0 %v2237
    %v2239 = vpop.xlane.xlu0 %2238
    %v2240 = vsel %vm62, %v2156, 0.0
    %2241 = vadd.xlane.f32.xlu0 %v2240
    %v2242 = vpop.xlane.xlu0 %2241
    %v2243 = vsel %vm62, %v2157, 0.0
    %2244 = vadd.xlane.f32.xlu0 %v2243
    %v2245 = vpop.xlane.xlu0 %2244
    %v2246 = vsel %vm62, %v2158, 0.0
    %2247 = vadd.xlane.f32.xlu0 %v2246
    %v2248 = vpop.xlane.xlu0 %2247
    %v2249 = vsel %vm62, %v2159, 0.0
    %2250 = vadd.xlane.f32.xlu0 %v2249
    %v2251 = vpop.xlane.xlu0 %2250
    %v2252 = vsel %vm62, %v2160, 0.0
    %2253 = vadd.xlane.f32.xlu0 %v2252
    %v2254 = vpop.xlane.xlu0 %2253
    %v2255 = vsel %vm62, %v2161, 0.0
    %2256 = vadd.xlane.f32.xlu0 %v2255
    %v2257 = vpop.xlane.xlu0 %2256
    %v2258 = vmul.f32 %v2164, %v480
    %v2259 = vmul.f32 %v2167, %v480
    %v2260 = vmul.f32 %v2170, %v480
    %v2261 = vmul.f32 %v2173, %v480
    %v2262 = vmul.f32 %v2176, %v480
    %v2263 = vmul.f32 %v2179, %v480
    %v2264 = vmul.f32 %v2182, %v480
    %v2265 = vmul.f32 %v2185, %v480
    %v2266 = vmul.f32 %v2188, %v480
    %v2267 = vmul.f32 %v2191, %v480
    %v2268 = vmul.f32 %v2194, %v480
    %v2269 = vmul.f32 %v2197, %v480
    %v2270 = vmul.f32 %v2200, %v480
    %v2271 = vmul.f32 %v2203, %v480
    %v2272 = vmul.f32 %v2206, %v480
    %v2273 = vmul.f32 %v2209, %v480
    %v2274 = vmul.f32 %v2212, %v480
    %v2275 = vmul.f32 %v2215, %v480
    %v2276 = vmul.f32 %v2218, %v480
    %v2277 = vmul.f32 %v2221, %v480
    %v2278 = vmul.f32 %v2224, %v480
    %v2279 = vmul.f32 %v2227, %v480
    %v2280 = vmul.f32 %v2230, %v480
    %v2281 = vmul.f32 %v2233, %v480
    %v2282 = vmul.f32 %v2236, %v480
    %v2283 = vmul.f32 %v2239, %v480
    %v2284 = vmul.f32 %v2242, %v480
    %v2285 = vmul.f32 %v2245, %v480
    %v2286 = vmul.f32 %v2248, %v480
    %v2287 = vmul.f32 %v2251, %v480
    %v2288 = vmul.f32 %v2254, %v480
    %v2289 = vmul.f32 %v2257, %v480
    %v2290 = vadd.f32 %v2258, 1e-05
    %v2291 = vadd.f32 %v2259, 1e-05
    %v2292 = vadd.f32 %v2260, 1e-05
    %v2293 = vadd.f32 %v2261, 1e-05
    %v2294 = vadd.f32 %v2262, 1e-05
    %v2295 = vadd.f32 %v2263, 1e-05
    %v2296 = vadd.f32 %v2264, 1e-05
    %v2297 = vadd.f32 %v2265, 1e-05
    %v2298 = vadd.f32 %v2266, 1e-05
    %v2299 = vadd.f32 %v2267, 1e-05
    %v2300 = vadd.f32 %v2268, 1e-05
    %v2301 = vadd.f32 %v2269, 1e-05
    %v2302 = vadd.f32 %v2270, 1e-05
    %v2303 = vadd.f32 %v2271, 1e-05
    %v2304 = vadd.f32 %v2272, 1e-05
    %v2305 = vadd.f32 %v2273, 1e-05
    %v2306 = vadd.f32 %v2274, 1e-05
    %v2307 = vadd.f32 %v2275, 1e-05
    %v2308 = vadd.f32 %v2276, 1e-05
    %v2309 = vadd.f32 %v2277, 1e-05
    %v2310 = vadd.f32 %v2278, 1e-05
    %v2311 = vadd.f32 %v2279, 1e-05
    %v2312 = vadd.f32 %v2280, 1e-05
    %v2313 = vadd.f32 %v2281, 1e-05
    %v2314 = vadd.f32 %v2282, 1e-05
    %v2315 = vadd.f32 %v2283, 1e-05
    %v2316 = vadd.f32 %v2284, 1e-05
    %v2317 = vadd.f32 %v2285, 1e-05
    %v2318 = vadd.f32 %v2286, 1e-05
    %v2319 = vadd.f32 %v2287, 1e-05
    %v2320 = vadd.f32 %v2288, 1e-05
    %v2321 = vadd.f32 %v2289, 1e-05
    %v2322 = vrsqrt.pop %v2290
    %v2323 = vrsqrt.pop %v2291
    %v2324 = vrsqrt.pop %v2292
    %v2325 = vrsqrt.pop %v2293
    %v2326 = vrsqrt.pop %v2294
    %v2327 = vrsqrt.pop %v2295
    %v2328 = vrsqrt.pop %v2296
    %v2329 = vrsqrt.pop %v2297
    %v2330 = vrsqrt.pop %v2298
    %v2331 = vrsqrt.pop %v2299
    %v2332 = vrsqrt.pop %v2300
    %v2333 = vrsqrt.pop %v2301
    %v2334 = vrsqrt.pop %v2302
    %v2335 = vrsqrt.pop %v2303
    %v2336 = vrsqrt.pop %v2304
    %v2337 = vrsqrt.pop %v2305
    %v2338 = vrsqrt.pop %v2306
    %v2339 = vrsqrt.pop %v2307
    %v2340 = vrsqrt.pop %v2308
    %v2341 = vrsqrt.pop %v2309
    %v2342 = vrsqrt.pop %v2310
    %v2343 = vrsqrt.pop %v2311
    %v2344 = vrsqrt.pop %v2312
    %v2345 = vrsqrt.pop %v2313
    %v2346 = vrsqrt.pop %v2314
    %v2347 = vrsqrt.pop %v2315
    %v2348 = vrsqrt.pop %v2316
    %v2349 = vrsqrt.pop %v2317
    %v2350 = vrsqrt.pop %v2318
    %v2351 = vrsqrt.pop %v2319
    %v2352 = vrsqrt.pop %v2320
    %v2353 = vrsqrt.pop %v2321
    %v2354 = vmul.f32 %v2098, %v2322
    %v2355 = vmul.f32 %v2099, %v2323
    %v2356 = vmul.f32 %v2100, %v2324
    %v2357 = vmul.f32 %v2101, %v2325
    %v2358 = vmul.f32 %v2102, %v2326
    %v2359 = vmul.f32 %v2103, %v2327
    %v2360 = vmul.f32 %v2104, %v2328
    %v2361 = vmul.f32 %v2105, %v2329
    %v2362 = vmul.f32 %v2106, %v2330
    %v2363 = vmul.f32 %v2107, %v2331
    %v2364 = vmul.f32 %v2108, %v2332
    %v2365 = vmul.f32 %v2109, %v2333
    %v2366 = vmul.f32 %v2110, %v2334
    %v2367 = vmul.f32 %v2111, %v2335
    %v2368 = vmul.f32 %v2112, %v2336
    %v2369 = vmul.f32 %v2113, %v2337
    %v2370 = vmul.f32 %v2114, %v2338
    %v2371 = vmul.f32 %v2115, %v2339
    %v2372 = vmul.f32 %v2116, %v2340
    %v2373 = vmul.f32 %v2117, %v2341
    %v2374 = vmul.f32 %v2118, %v2342
    %v2375 = vmul.f32 %v2119, %v2343
    %v2376 = vmul.f32 %v2120, %v2344
    %v2377 = vmul.f32 %v2121, %v2345
    %v2378 = vmul.f32 %v2122, %v2346
    %v2379 = vmul.f32 %v2123, %v2347
    %v2380 = vmul.f32 %v2124, %v2348
    %v2381 = vmul.f32 %v2125, %v2349
    %v2382 = vmul.f32 %v2126, %v2350
    %v2383 = vmul.f32 %v2127, %v2351
    %v2384 = vmul.f32 %v2128, %v2352
    %v2385 = vmul.f32 %v2129, %v2353
    %v2386 = vlaneseq
    %v2387 = vshrl.u32 %v2386, 7
    %v2388 = vsub.s32 4, %v2387
    %v2389 = vrot.slane %v53, %v2388
    %v2390 = vmul.f32 %v2354, %v2389
    %v2391 = vmul.f32 %v2355, %v2389
    %v2392 = vmul.f32 %v2356, %v2389
    %v2393 = vmul.f32 %v2357, %v2389
    %v2394 = vmul.f32 %v2358, %v2389
    %v2395 = vmul.f32 %v2359, %v2389
    %v2396 = vmul.f32 %v2360, %v2389
    %v2397 = vmul.f32 %v2361, %v2389
    %v2398 = vmul.f32 %v2362, %v2389
    %v2399 = vmul.f32 %v2363, %v2389
    %v2400 = vmul.f32 %v2364, %v2389
    %v2401 = vmul.f32 %v2365, %v2389
    %v2402 = vmul.f32 %v2366, %v2389
    %v2403 = vmul.f32 %v2367, %v2389
    %v2404 = vmul.f32 %v2368, %v2389
    %v2405 = vmul.f32 %v2369, %v2389
    %v2406 = vmul.f32 %v2370, %v2389
    %v2407 = vmul.f32 %v2371, %v2389
    %v2408 = vmul.f32 %v2372, %v2389
    %v2409 = vmul.f32 %v2373, %v2389
    %v2410 = vmul.f32 %v2374, %v2389
    %v2411 = vmul.f32 %v2375, %v2389
    %v2412 = vmul.f32 %v2376, %v2389
    %v2413 = vmul.f32 %v2377, %v2389
    %v2414 = vmul.f32 %v2378, %v2389
    %v2415 = vmul.f32 %v2379, %v2389
    %v2416 = vmul.f32 %v2380, %v2389
    %v2417 = vmul.f32 %v2381, %v2389
    %v2418 = vmul.f32 %v2382, %v2389
    %v2419 = vmul.f32 %v2383, %v2389
    %v2420 = vmul.f32 %v2384, %v2389
    %v2421 = vmul.f32 %v2385, %v2389
    %v2422 = vlaneseq
    %v2423 = vshrl.u32 %v2422, 7
    %v2424 = vsub.s32 5, %v2423
    %v2425 = vrot.slane %v53, %v2424
    %v2426 = vadd.f32 %v2390, %v2425
    %v2427 = vadd.f32 %v2391, %v2425
    %v2428 = vadd.f32 %v2392, %v2425
    %v2429 = vadd.f32 %v2393, %v2425
    %v2430 = vadd.f32 %v2394, %v2425
    %v2431 = vadd.f32 %v2395, %v2425
    %v2432 = vadd.f32 %v2396, %v2425
    %v2433 = vadd.f32 %v2397, %v2425
    %v2434 = vadd.f32 %v2398, %v2425
    %v2435 = vadd.f32 %v2399, %v2425
    %v2436 = vadd.f32 %v2400, %v2425
    %v2437 = vadd.f32 %v2401, %v2425
    %v2438 = vadd.f32 %v2402, %v2425
    %v2439 = vadd.f32 %v2403, %v2425
    %v2440 = vadd.f32 %v2404, %v2425
    %v2441 = vadd.f32 %v2405, %v2425
    %v2442 = vadd.f32 %v2406, %v2425
    %v2443 = vadd.f32 %v2407, %v2425
    %v2444 = vadd.f32 %v2408, %v2425
    %v2445 = vadd.f32 %v2409, %v2425
    %v2446 = vadd.f32 %v2410, %v2425
    %v2447 = vadd.f32 %v2411, %v2425
    %v2448 = vadd.f32 %v2412, %v2425
    %v2449 = vadd.f32 %v2413, %v2425
    %v2450 = vadd.f32 %v2414, %v2425
    %v2451 = vadd.f32 %v2415, %v2425
    %v2452 = vadd.f32 %v2416, %v2425
    %v2453 = vadd.f32 %v2417, %v2425
    %v2454 = vadd.f32 %v2418, %v2425
    %v2455 = vadd.f32 %v2419, %v2425
    %v2456 = vadd.f32 %v2420, %v2425
    %v2457 = vadd.f32 %v2421, %v2425
    %2490 = vrot.lane.b32.xlu0 %v1577, 96
    %v2491 = vpop.permute.xlu0 %2490
    %2492 = vrot.lane.b32.xlu0 %v1578, 96
    %v2493 = vpop.permute.xlu0 %2492
    %2494 = vrot.lane.b32.xlu0 %v1579, 96
    %v2495 = vpop.permute.xlu0 %2494
    %2496 = vrot.lane.b32.xlu0 %v1580, 96
    %v2497 = vpop.permute.xlu0 %2496
    %2498 = vrot.lane.b32.xlu0 %v1581, 96
    %v2499 = vpop.permute.xlu0 %2498
    %2500 = vrot.lane.b32.xlu0 %v1582, 96
    %v2501 = vpop.permute.xlu0 %2500
    %2502 = vrot.lane.b32.xlu0 %v1583, 96
    %v2503 = vpop.permute.xlu0 %2502
    %2504 = vrot.lane.b32.xlu0 %v1584, 96
    %v2505 = vpop.permute.xlu0 %2504
    %2506 = vrot.lane.b32.xlu0 %v1585, 96
    %v2507 = vpop.permute.xlu0 %2506
    %2508 = vrot.lane.b32.xlu0 %v1586, 96
    %v2509 = vpop.permute.xlu0 %2508
    %2510 = vrot.lane.b32.xlu0 %v1587, 96
    %v2511 = vpop.permute.xlu0 %2510
    %2512 = vrot.lane.b32.xlu0 %v1588, 96
    %v2513 = vpop.permute.xlu0 %2512
    %2514 = vrot.lane.b32.xlu0 %v1589, 96
    %v2515 = vpop.permute.xlu0 %2514
    %2516 = vrot.lane.b32.xlu0 %v1590, 96
    %v2517 = vpop.permute.xlu0 %2516
    %2518 = vrot.lane.b32.xlu0 %v1591, 96
    %v2519 = vpop.permute.xlu0 %2518
    %2520 = vrot.lane.b32.xlu0 %v1592, 96
    %v2521 = vpop.permute.xlu0 %2520
    %2522 = vrot.lane.b32.xlu0 %v1593, 96
    %v2523 = vpop.permute.xlu0 %2522
    %2524 = vrot.lane.b32.xlu0 %v1594, 96
    %v2525 = vpop.permute.xlu0 %2524
    %2526 = vrot.lane.b32.xlu0 %v1595, 96
    %v2527 = vpop.permute.xlu0 %2526
    %2528 = vrot.lane.b32.xlu0 %v1596, 96
    %v2529 = vpop.permute.xlu0 %2528
    %2530 = vrot.lane.b32.xlu0 %v1597, 96
    %v2531 = vpop.permute.xlu0 %2530
    %2532 = vrot.lane.b32.xlu0 %v1598, 96
    %v2533 = vpop.permute.xlu0 %2532
    %2534 = vrot.lane.b32.xlu0 %v1599, 96
    %v2535 = vpop.permute.xlu0 %2534
    %2536 = vrot.lane.b32.xlu0 %v1600, 96
    %v2537 = vpop.permute.xlu0 %2536
    %2538 = vrot.lane.b32.xlu0 %v1601, 96
    %v2539 = vpop.permute.xlu0 %2538
    %2540 = vrot.lane.b32.xlu0 %v1602, 96
    %v2541 = vpop.permute.xlu0 %2540
    %2542 = vrot.lane.b32.xlu0 %v1603, 96
    %v2543 = vpop.permute.xlu0 %2542
    %2544 = vrot.lane.b32.xlu0 %v1604, 96
    %v2545 = vpop.permute.xlu0 %2544
    %2546 = vrot.lane.b32.xlu0 %v1605, 96
    %v2547 = vpop.permute.xlu0 %2546
    %2548 = vrot.lane.b32.xlu0 %v1606, 96
    %v2549 = vpop.permute.xlu0 %2548
    %2550 = vrot.lane.b32.xlu0 %v1607, 96
    %v2551 = vpop.permute.xlu0 %2550
    %2552 = vrot.lane.b32.xlu0 %v1608, 96
    %v2553 = vpop.permute.xlu0 %2552
    %v2586 = vadd.f32 %v2426, %v2491
    %v2587 = vadd.f32 %v2427, %v2493
    %v2588 = vadd.f32 %v2428, %v2495
    %v2589 = vadd.f32 %v2429, %v2497
    %v2590 = vadd.f32 %v2430, %v2499
    %v2591 = vadd.f32 %v2431, %v2501
    %v2592 = vadd.f32 %v2432, %v2503
    %v2593 = vadd.f32 %v2433, %v2505
    %v2594 = vadd.f32 %v2434, %v2507
    %v2595 = vadd.f32 %v2435, %v2509
    %v2596 = vadd.f32 %v2436, %v2511
    %v2597 = vadd.f32 %v2437, %v2513
    %v2598 = vadd.f32 %v2438, %v2515
    %v2599 = vadd.f32 %v2439, %v2517
    %v2600 = vadd.f32 %v2440, %v2519
    %v2601 = vadd.f32 %v2441, %v2521
    %v2602 = vadd.f32 %v2442, %v2523
    %v2603 = vadd.f32 %v2443, %v2525
    %v2604 = vadd.f32 %v2444, %v2527
    %v2605 = vadd.f32 %v2445, %v2529
    %v2606 = vadd.f32 %v2446, %v2531
    %v2607 = vadd.f32 %v2447, %v2533
    %v2608 = vadd.f32 %v2448, %v2535
    %v2609 = vadd.f32 %v2449, %v2537
    %v2610 = vadd.f32 %v2450, %v2539
    %v2611 = vadd.f32 %v2451, %v2541
    %v2612 = vadd.f32 %v2452, %v2543
    %v2613 = vadd.f32 %v2453, %v2545
    %v2614 = vadd.f32 %v2454, %v2547
    %v2615 = vadd.f32 %v2455, %v2549
    %v2616 = vadd.f32 %v2456, %v2551
    %v2617 = vadd.f32 %v2457, %v2553
    %v2618 = vmax.f32 %v2586, 0.0
    %v2619 = vmax.f32 %v2587, 0.0
    %v2620 = vmax.f32 %v2588, 0.0
    %v2621 = vmax.f32 %v2589, 0.0
    %v2622 = vmax.f32 %v2590, 0.0
    %v2623 = vmax.f32 %v2591, 0.0
    %v2624 = vmax.f32 %v2592, 0.0
    %v2625 = vmax.f32 %v2593, 0.0
    %v2626 = vmax.f32 %v2594, 0.0
    %v2627 = vmax.f32 %v2595, 0.0
    %v2628 = vmax.f32 %v2596, 0.0
    %v2629 = vmax.f32 %v2597, 0.0
    %v2630 = vmax.f32 %v2598, 0.0
    %v2631 = vmax.f32 %v2599, 0.0
    %v2632 = vmax.f32 %v2600, 0.0
    %v2633 = vmax.f32 %v2601, 0.0
    %v2634 = vmax.f32 %v2602, 0.0
    %v2635 = vmax.f32 %v2603, 0.0
    %v2636 = vmax.f32 %v2604, 0.0
    %v2637 = vmax.f32 %v2605, 0.0
    %v2638 = vmax.f32 %v2606, 0.0
    %v2639 = vmax.f32 %v2607, 0.0
    %v2640 = vmax.f32 %v2608, 0.0
    %v2641 = vmax.f32 %v2609, 0.0
    %v2642 = vmax.f32 %v2610, 0.0
    %v2643 = vmax.f32 %v2611, 0.0
    %v2644 = vmax.f32 %v2612, 0.0
    %v2645 = vmax.f32 %v2613, 0.0
    %v2646 = vmax.f32 %v2614, 0.0
    %v2647 = vmax.f32 %v2615, 0.0
    %v2648 = vmax.f32 %v2616, 0.0
    %v2649 = vmax.f32 %v2617, 0.0
    %v2650 = vld [vmem:[%s3] sm:$0xff]
    %v2651 = vld [vmem:[%s3 + $0x8] sm:$0xff]
    %v2652 = vld [vmem:[%s3 + $0x10] sm:$0xff]
    %v2653 = vld [vmem:[%s3 + $0x18] sm:$0xff]
    %v2654 = vlaneseq
    %v2655 = vshrl.u32 %v2654, 7
    %v2656 = vsub.s32 6, %v2655
    %v2657 = vrot.slane %v53, %v2656
    %v2659 = vsel %vm62, %v2618, 0
    %v2662 = vsel %vm62, %v2619, 0
    %v2665 = vsel %vm62, %v2620, 0
    %v2668 = vsel %vm62, %v2621, 0
    %v2671 = vsel %vm62, %v2622, 0
    %v2674 = vsel %vm62, %v2623, 0
    %v2677 = vsel %vm62, %v2624, 0
    %v2680 = vsel %vm62, %v2625, 0
    %v2683 = vsel %vm62, %v2626, 0
    %v2686 = vsel %vm62, %v2627, 0
    %v2689 = vsel %vm62, %v2628, 0
    %v2692 = vsel %vm62, %v2629, 0
    %v2695 = vsel %vm62, %v2630, 0
    %v2698 = vsel %vm62, %v2631, 0
    %v2701 = vsel %vm62, %v2632, 0
    %v2704 = vsel %vm62, %v2633, 0
    %v2707 = vsel %vm62, %v2634, 0
    %v2710 = vsel %vm62, %v2635, 0
    %v2713 = vsel %vm62, %v2636, 0
    %v2716 = vsel %vm62, %v2637, 0
    %v2719 = vsel %vm62, %v2638, 0
    %v2722 = vsel %vm62, %v2639, 0
    %v2725 = vsel %vm62, %v2640, 0
    %v2728 = vsel %vm62, %v2641, 0
    %v2731 = vsel %vm62, %v2642, 0
    %v2734 = vsel %vm62, %v2643, 0
    %v2737 = vsel %vm62, %v2644, 0
    %v2740 = vsel %vm62, %v2645, 0
    %v2743 = vsel %vm62, %v2646, 0
    %v2746 = vsel %vm62, %v2647, 0
    %v2749 = vsel %vm62, %v2648, 0
    %v2752 = vsel %vm62, %v2649, 0
    %2754 = vmatprep.subr.mxu0 0.0
    %2755 = vmatpush1.msra.mxu0 0.0
    %2756 = vmatprep.subr.mxu0 0.0
    %2757 = vmatpush1.msra.mxu0 0.0
    %2758 = vmatprep.subr.mxu0 0.0
    %2759 = vmatpush1.msra.mxu0 0.0
    %2760 = vmatprep.subr.mxu0 0.0
    %2761 = vmatpush1.msra.mxu0 0.0
    %2762 = vmatprep.subr.mxu0 0.0
    %2763 = vmatpush1.msra.mxu0 0.0
    %2764 = vmatprep.subr.mxu0 0.0
    %2765 = vmatpush1.msra.mxu0 0.0
    %2766 = vmatprep.subr.mxu0 0.0
    %2767 = vmatpush1.msra.mxu0 0.0
    %2768 = vmatprep.subr.mxu0 0.0
    %2769 = vmatpush1.msra.mxu0 0.0
    %2770 = vmatprep.subr.mxu0 0.0
    %2771 = vmatpush1.msra.mxu0 0.0
    %2772 = vmatprep.subr.mxu0 0.0
    %2773 = vmatpush1.msra.mxu0 0.0
    %2774 = vmatprep.subr.mxu0 0.0
    %2775 = vmatpush1.msra.mxu0 0.0
    %2776 = vmatprep.subr.mxu0 0.0
    %2777 = vmatpush1.msra.mxu0 0.0
    %2778 = vmatprep.subr.mxu0 0.0
    %2779 = vmatpush1.msra.mxu0 %v2653
    %2780 = vmatprep.subr.mxu0 0.0
    %2781 = vmatpush1.msra.mxu0 %v2652
    %2782 = vmatprep.subr.mxu0 0.0
    %2783 = vmatpush1.msra.mxu0 %v2651
    %2784 = vmatprep.subr.mxu0 0.0
    %2785 = vmatpush1.msra.mxu0 %v2650
    %2786 = vmatprep.subr.mxu0 0.0
    %2787 = vmatpush2.msra.mxu0 0.0
    %2788 = vmatprep.subr.mxu0 0.0
    %2789 = vmatpush2.msra.mxu0 0.0
    %2790 = vmatprep.subr.mxu0 0.0
    %2791 = vmatpush2.msra.mxu0 0.0
    %2792 = vmatprep.subr.mxu0 0.0
    %2793 = vmatpush2.msra.mxu0 0.0
    %2794 = vmatprep.subr.mxu0 0.0
    %2795 = vmatpush2.msra.mxu0 0.0
    %2796 = vmatprep.subr.mxu0 0.0
    %2797 = vmatpush2.msra.mxu0 0.0
    %2798 = vmatprep.subr.mxu0 0.0
    %2799 = vmatpush2.msra.mxu0 0.0
    %2800 = vmatprep.subr.mxu0 0.0
    %2801 = vmatpush2.msra.mxu0 0.0
    %2802 = vmatprep.subr.mxu0 0.0
    %2803 = vmatpush2.msra.mxu0 0.0
    %2804 = vmatprep.subr.mxu0 0.0
    %2805 = vmatpush2.msra.mxu0 0.0
    %2806 = vmatprep.subr.mxu0 0.0
    %2807 = vmatpush2.msra.mxu0 0.0
    %2808 = vmatprep.subr.mxu0 0.0
    %2809 = vmatpush2.msra.mxu0 0.0
    %2810 = vmatprep.subr.mxu0 0.0
    %2811 = vmatpush2.msra.mxu0 0.0
    %2812 = vmatprep.subr.mxu0 0.0
    %2813 = vmatpush2.msra.mxu0 0.0
    %2814 = vmatprep.subr.mxu0 0.0
    %2815 = vmatpush2.msra.mxu0 0.0
    %2816 = vmatprep.subr.mxu0 0.0
    %2817 = vmatpush2.msra.mxu0 0.0
    %2818 = vmatprep.mubr.f32.mxu0 0.0
    %2819 = vmatmul.mubr.f32.gmra.mxu0 %v2659
    %v2820 = vpop.f32.mrf.mxu0
    %v2821 = vadd.f32 %v2657, %v2820
    %v2822 = vpop.f32.mrf.mxu0
    %2823 = vmatprep.mubr.f32.mxu0 0.0
    %2824 = vmatmul.mubr.f32.gmra.mxu0 %v2662
    %v2825 = vpop.f32.mrf.mxu0
    %v2826 = vadd.f32 %v2657, %v2825
    %v2827 = vpop.f32.mrf.mxu0
    %2828 = vmatprep.mubr.f32.mxu0 0.0
    %2829 = vmatmul.mubr.f32.gmra.mxu0 %v2665
    %v2830 = vpop.f32.mrf.mxu0
    %v2831 = vadd.f32 %v2657, %v2830
    %v2832 = vpop.f32.mrf.mxu0
    %2833 = vmatprep.mubr.f32.mxu0 0.0
    %2834 = vmatmul.mubr.f32.gmra.mxu0 %v2668
    %v2835 = vpop.f32.mrf.mxu0
    %v2836 = vadd.f32 %v2657, %v2835
    %v2837 = vpop.f32.mrf.mxu0
    %2838 = vmatprep.mubr.f32.mxu0 0.0
    %2839 = vmatmul.mubr.f32.gmra.mxu0 %v2671
    %v2840 = vpop.f32.mrf.mxu0
    %v2841 = vadd.f32 %v2657, %v2840
    %v2842 = vpop.f32.mrf.mxu0
    %2843 = vmatprep.mubr.f32.mxu0 0.0
    %2844 = vmatmul.mubr.f32.gmra.mxu0 %v2674
    %v2845 = vpop.f32.mrf.mxu0
    %v2846 = vadd.f32 %v2657, %v2845
    %v2847 = vpop.f32.mrf.mxu0
    %2848 = vmatprep.mubr.f32.mxu0 0.0
    %2849 = vmatmul.mubr.f32.gmra.mxu0 %v2677
    %v2850 = vpop.f32.mrf.mxu0
    %v2851 = vadd.f32 %v2657, %v2850
    %v2852 = vpop.f32.mrf.mxu0
    %2853 = vmatprep.mubr.f32.mxu0 0.0
    %2854 = vmatmul.mubr.f32.gmra.mxu0 %v2680
    %v2855 = vpop.f32.mrf.mxu0
    %v2856 = vadd.f32 %v2657, %v2855
    %v2857 = vpop.f32.mrf.mxu0
    %2858 = vmatprep.mubr.f32.mxu0 0.0
    %2859 = vmatmul.mubr.f32.gmra.mxu0 %v2683
    %v2860 = vpop.f32.mrf.mxu0
    %v2861 = vadd.f32 %v2657, %v2860
    %v2862 = vpop.f32.mrf.mxu0
    %2863 = vmatprep.mubr.f32.mxu0 0.0
    %2864 = vmatmul.mubr.f32.gmra.mxu0 %v2686
    %v2865 = vpop.f32.mrf.mxu0
    %v2866 = vadd.f32 %v2657, %v2865
    %v2867 = vpop.f32.mrf.mxu0
    %2868 = vmatprep.mubr.f32.mxu0 0.0
    %2869 = vmatmul.mubr.f32.gmra.mxu0 %v2689
    %v2870 = vpop.f32.mrf.mxu0
    %v2871 = vadd.f32 %v2657, %v2870
    %v2872 = vpop.f32.mrf.mxu0
    %2873 = vmatprep.mubr.f32.mxu0 0.0
    %2874 = vmatmul.mubr.f32.gmra.mxu0 %v2692
    %v2875 = vpop.f32.mrf.mxu0
    %v2876 = vadd.f32 %v2657, %v2875
    %v2877 = vpop.f32.mrf.mxu0
    %2878 = vmatprep.mubr.f32.mxu0 0.0
    %2879 = vmatmul.mubr.f32.gmra.mxu0 %v2695
    %v2880 = vpop.f32.mrf.mxu0
    %v2881 = vadd.f32 %v2657, %v2880
    %v2882 = vpop.f32.mrf.mxu0
    %2883 = vmatprep.mubr.f32.mxu0 0.0
    %2884 = vmatmul.mubr.f32.gmra.mxu0 %v2698
    %v2885 = vpop.f32.mrf.mxu0
    %v2886 = vadd.f32 %v2657, %v2885
    %v2887 = vpop.f32.mrf.mxu0
    %2888 = vmatprep.mubr.f32.mxu0 0.0
    %2889 = vmatmul.mubr.f32.gmra.mxu0 %v2701
    %v2890 = vpop.f32.mrf.mxu0
    %v2891 = vadd.f32 %v2657, %v2890
    %v2892 = vpop.f32.mrf.mxu0
    %2893 = vmatprep.mubr.f32.mxu0 0.0
    %2894 = vmatmul.mubr.f32.gmra.mxu0 %v2704
    %v2895 = vpop.f32.mrf.mxu0
    %v2896 = vadd.f32 %v2657, %v2895
    %v2897 = vpop.f32.mrf.mxu0
    %2898 = vmatprep.mubr.f32.mxu0 0.0
    %2899 = vmatmul.mubr.f32.gmra.mxu0 %v2707
    %v2900 = vpop.f32.mrf.mxu0
    %v2901 = vadd.f32 %v2657, %v2900
    %v2902 = vpop.f32.mrf.mxu0
    %2903 = vmatprep.mubr.f32.mxu0 0.0
    %2904 = vmatmul.mubr.f32.gmra.mxu0 %v2710
    %v2905 = vpop.f32.mrf.mxu0
    %v2906 = vadd.f32 %v2657, %v2905
    %v2907 = vpop.f32.mrf.mxu0
    %2908 = vmatprep.mubr.f32.mxu0 0.0
    %2909 = vmatmul.mubr.f32.gmra.mxu0 %v2713
    %v2910 = vpop.f32.mrf.mxu0
    %v2911 = vadd.f32 %v2657, %v2910
    %v2912 = vpop.f32.mrf.mxu0
    %2913 = vmatprep.mubr.f32.mxu0 0.0
    %2914 = vmatmul.mubr.f32.gmra.mxu0 %v2716
    %v2915 = vpop.f32.mrf.mxu0
    %v2916 = vadd.f32 %v2657, %v2915
    %v2917 = vpop.f32.mrf.mxu0
    %2918 = vmatprep.mubr.f32.mxu0 0.0
    %2919 = vmatmul.mubr.f32.gmra.mxu0 %v2719
    %v2920 = vpop.f32.mrf.mxu0
    %v2921 = vadd.f32 %v2657, %v2920
    %v2922 = vpop.f32.mrf.mxu0
    %2923 = vmatprep.mubr.f32.mxu0 0.0
    %2924 = vmatmul.mubr.f32.gmra.mxu0 %v2722
    %v2925 = vpop.f32.mrf.mxu0
    %v2926 = vadd.f32 %v2657, %v2925
    %v2927 = vpop.f32.mrf.mxu0
    %2928 = vmatprep.mubr.f32.mxu0 0.0
    %2929 = vmatmul.mubr.f32.gmra.mxu0 %v2725
    %v2930 = vpop.f32.mrf.mxu0
    %v2931 = vadd.f32 %v2657, %v2930
    %v2932 = vpop.f32.mrf.mxu0
    %2933 = vmatprep.mubr.f32.mxu0 0.0
    %2934 = vmatmul.mubr.f32.gmra.mxu0 %v2728
    %v2935 = vpop.f32.mrf.mxu0
    %v2936 = vadd.f32 %v2657, %v2935
    %v2937 = vpop.f32.mrf.mxu0
    %2938 = vmatprep.mubr.f32.mxu0 0.0
    %2939 = vmatmul.mubr.f32.gmra.mxu0 %v2731
    %v2940 = vpop.f32.mrf.mxu0
    %v2941 = vadd.f32 %v2657, %v2940
    %v2942 = vpop.f32.mrf.mxu0
    %2943 = vmatprep.mubr.f32.mxu0 0.0
    %2944 = vmatmul.mubr.f32.gmra.mxu0 %v2734
    %v2945 = vpop.f32.mrf.mxu0
    %v2946 = vadd.f32 %v2657, %v2945
    %v2947 = vpop.f32.mrf.mxu0
    %2948 = vmatprep.mubr.f32.mxu0 0.0
    %2949 = vmatmul.mubr.f32.gmra.mxu0 %v2737
    %v2950 = vpop.f32.mrf.mxu0
    %v2951 = vadd.f32 %v2657, %v2950
    %v2952 = vpop.f32.mrf.mxu0
    %2953 = vmatprep.mubr.f32.mxu0 0.0
    %2954 = vmatmul.mubr.f32.gmra.mxu0 %v2740
    %v2955 = vpop.f32.mrf.mxu0
    %v2956 = vadd.f32 %v2657, %v2955
    %v2957 = vpop.f32.mrf.mxu0
    %2958 = vmatprep.mubr.f32.mxu0 0.0
    %2959 = vmatmul.mubr.f32.gmra.mxu0 %v2743
    %v2960 = vpop.f32.mrf.mxu0
    %v2961 = vadd.f32 %v2657, %v2960
    %v2962 = vpop.f32.mrf.mxu0
    %2963 = vmatprep.mubr.f32.mxu0 0.0
    %2964 = vmatmul.mubr.f32.gmra.mxu0 %v2746
    %v2965 = vpop.f32.mrf.mxu0
    %v2966 = vadd.f32 %v2657, %v2965
    %v2967 = vpop.f32.mrf.mxu0
    %2968 = vmatprep.mubr.f32.mxu0 0.0
    %2969 = vmatmul.mubr.f32.gmra.mxu0 %v2749
    %v2970 = vpop.f32.mrf.mxu0
    %v2971 = vadd.f32 %v2657, %v2970
    %v2972 = vpop.f32.mrf.mxu0
    %2973 = vmatprep.mubr.f32.mxu0 0.0
    %2974 = vmatmul.mubr.f32.gmra.mxu0 %v2752
    %v2975 = vpop.f32.mrf.mxu0
    %v2976 = vadd.f32 %v2657, %v2975
    %v2977 = vpop.f32.mrf.mxu0
    %2978 = vdwg.mxu0
    %2979 = vst [vmem:[#allocation2] sm:$0xff] %v2821
    %2980 = vst [vmem:[#allocation2 + $0x8] sm:$0xff] %v2826
    %2981 = vst [vmem:[#allocation2 + $0x10] sm:$0xff] %v2831
    %2982 = vst [vmem:[#allocation2 + $0x18] sm:$0xff] %v2836
    %2983 = vst [vmem:[#allocation2 + $0x20] sm:$0xff] %v2841
    %2984 = vst [vmem:[#allocation2 + $0x28] sm:$0xff] %v2846
    %2985 = vst [vmem:[#allocation2 + $0x30] sm:$0xff] %v2851
    %2986 = vst [vmem:[#allocation2 + $0x38] sm:$0xff] %v2856
    %2987 = vst [vmem:[#allocation2 + $0x40] sm:$0xff] %v2861
    %2988 = vst [vmem:[#allocation2 + $0x48] sm:$0xff] %v2866
    %2989 = vst [vmem:[#allocation2 + $0x50] sm:$0xff] %v2871
    %2990 = vst [vmem:[#allocation2 + $0x58] sm:$0xff] %v2876
    %2991 = vst [vmem:[#allocation2 + $0x60] sm:$0xff] %v2881
    %2992 = vst [vmem:[#allocation2 + $0x68] sm:$0xff] %v2886
    %2993 = vst [vmem:[#allocation2 + $0x70] sm:$0xff] %v2891
    %2994 = vst [vmem:[#allocation2 + $0x78] sm:$0xff] %v2896
    %2995 = vst [vmem:[#allocation2 + $0x80] sm:$0xff] %v2901
    %2996 = vst [vmem:[#allocation2 + $0x88] sm:$0xff] %v2906
    %2997 = vst [vmem:[#allocation2 + $0x90] sm:$0xff] %v2911
    %2998 = vst [vmem:[#allocation2 + $0x98] sm:$0xff] %v2916
    %2999 = vst [vmem:[#allocation2 + $0xa0] sm:$0xff] %v2921
    %3000 = vst [vmem:[#allocation2 + $0xa8] sm:$0xff] %v2926
    %3001 = vst [vmem:[#allocation2 + $0xb0] sm:$0xff] %v2931
    %3002 = vst [vmem:[#allocation2 + $0xb8] sm:$0xff] %v2936
    %3003 = vst [vmem:[#allocation2 + $0xc0] sm:$0xff] %v2941
    %3004 = vst [vmem:[#allocation2 + $0xc8] sm:$0xff] %v2946
    %3005 = vst [vmem:[#allocation2 + $0xd0] sm:$0xff] %v2951
    %3006 = vst [vmem:[#allocation2 + $0xd8] sm:$0xff] %v2956
    %3007 = vst [vmem:[#allocation2 + $0xe0] sm:$0xff] %v2961
    %3008 = vst [vmem:[#allocation2 + $0xe8] sm:$0xff] %v2966
    %3009 = vst [vmem:[#allocation2 + $0xf0] sm:$0xff] %v2971
    %3010 = vst [vmem:[#allocation2 + $0xf8] sm:$0xff] %v2976
    // Predicated region
    $region22: #{tpu_custom_call.1} parent=1 // pred_check
      _
    $region23: #{tpu_custom_call.1} parent=1 // pred_check_branch
      %3012 = sbr.rel (0) target = $region25
    $region24: #{tpu_custom_call.1} parent=1 // pred_region
      %s3014 = ssub.s32 4096, 4096
      %3015 = vsyncadd [#allocation3], %s3014
      %s3016 = sshll.u32 [#allocation2], 4
      %s3017 = int_to_ptr.vmem [resolvable:$true] %s3016
      %3022 = dma.vmem_to_hbm [thread:$0]  %s3017, 4096, %s5, [#allocation3], 128, 128, 8
    $region25: #{tpu_custom_call.1} parent=1 // pred_fallthru
      _
    // Predicated region
    $region26: #{tpu_custom_call.1} parent=1 // pred_check
      _
    $region27: #{tpu_custom_call.1} parent=1 // pred_check_branch
      %3024 = sbr.rel (0) target = $region29
    $region28: #{tpu_custom_call.1} parent=1 // pred_region
      %3025 = dma.done [#allocation3], 4096
    $region29: #{tpu_custom_call.1} parent=1 // pred_fallthru
      _
    %3026 = vsyncpa [#allocation3], 1

</llo_original>
